<compile_context>
chip_gen: v7x
topology: tpu7x:2x2x1
jax: 0.10.0
libtpu: 0.0.40
codegen_flags: <defaults>
</compile_context>

<pallas_src>
import functools

import jax
import jax.numpy as jnp
from jax.experimental import pallas as pl
from jax.experimental.pallas import tpu as pltpu

# ---------------- static layout constants ----------------
EMB_VOCABS = (9, 16, 2, 6, 42, 15)      # nn.Embedding sizes (padding_idx=0)
EMB_OFFSETS = (0, 9, 25, 27, 33, 75)    # row offset of each table in the stacked selector
TOTAL_VOCAB = 90                        # sum(EMB_VOCABS)
NUM_RAW_DEEP = 5                        # x[:, 16:21]
NUM_WIDE = 7                            # x[:, 0:7]

X_ROWS = 24                             # 21 input columns, zero-padded to 24 (3 sublane groups)
SEL_ROWS = 128                          # 90 vocab rows, padded to 128
H1_PAD = 128                            # linear1 out 100 -> 128
H2_PAD = 64                             # linear2 out 50 -> 64
RAW_PAD = 8                             # 5 raw deep cols -> 8 (cols 5:8 zero weights)
WIDE_PAD = 8                            # 7 wide cols -> 8 (col 7 zero weight)
NUM_CLASSES = 2


def _round_up(n, m):
    return (n + m - 1) // m * m


def _choose_tile(batch, b_tile):
    """Pick batch-tile size bt and padded batch b_pad (b_pad % bt == 0)."""
    b_ceil = _round_up(max(batch, 1), 128)
    bt = min(_round_up(b_tile, 128), b_ceil)
    # v7x megacore: keep >= 2 grid steps when the batch allows it, so
    # dimension_semantics=("parallel",) can shard across both TensorCores.
    if b_ceil >= 256 and b_ceil <= bt:
        bt = _round_up(b_ceil // 2, 128)
    b_pad = _round_up(b_ceil, bt)
    return bt, b_pad


# ---------------- the kernel (one batch tile, feature-major / batch-on-lanes) ----------------
def wide_deep_kernel(x_ref, w1e_ref, w1r_ref, w2_ref, w3d_ref, w3w_ref, bias_ref, out_ref):
    """x_ref: [24, bt] int32; out_ref: [2, bt] f32 log-probs (lane-dense)."""
    bt = x_ref.shape[1]
    x = x_ref[...]                                       # [24, bt] int32
    xw = x[0:WIDE_PAD, :].astype(jnp.float32)            # wide cols 0:7 (+1 zero-weight col)
    xr = x[16:16 + RAW_PAD, :].astype(jnp.float32)       # raw deep cols 16:21 (+3 zero pad)

    # --- multi-hot selector over the 6 disjoint vocab ranges (cheap VPU build) ---
    # out-of-range ids map to sentinel -1 -> no row hit -> zero embedding.
    row = jax.lax.broadcasted_iota(jnp.int32, (SEL_ROWS, bt), 0)
    hit = None
    for f, (off, voc) in enumerate(zip(EMB_OFFSETS, EMB_VOCABS)):
        idx = x[10 + f:11 + f, :]                                       # [1, bt]
        idx_g = jnp.where((idx >= 0) & (idx < voc), idx + off, -1)
        h = row == idx_g
        hit = h if hit is None else (hit | h)
    # single cast to the exact 0/1 bf16 selector (via f32 for a safe lowering path)
    sel = hit.astype(jnp.float32).astype(jnp.bfloat16)                  # [128, bt]

    # --- linear1 (embedding gather fused into the weight) + raw f32 path + relu ---
    h1 = (jnp.dot(w1e_ref[...], sel, preferred_element_type=jnp.float32)
          + jnp.dot(w1r_ref[...], xr, preferred_element_type=jnp.float32)
          + bias_ref[:, 0:1])                                           # [128, bt]
    h1 = jnp.maximum(h1, 0.0)

    # --- linear2 + relu (bf16 MXU, f32 accumulate) ---
    h2 = jnp.dot(w2_ref[...], h1.astype(jnp.bfloat16),
                 preferred_element_type=jnp.float32) + bias_ref[0:H2_PAD, 1:2]
    h2 = jnp.maximum(h2, 0.0)                                           # [64, bt]; rows 50:64 == 0

    # --- linear3 = deep dot + wide dot (both tiny, f32 on the MXU) ---
    logits = (jnp.dot(w3d_ref[...], h2, preferred_element_type=jnp.float32)
              + jnp.dot(w3w_ref[...], xw, preferred_element_type=jnp.float32)
              + bias_ref[0:NUM_CLASSES, 2:3])                           # [2, bt]

    # --- log_softmax over the 2 classes, single full-tile store ---
    l0 = logits[0:1, :]
    l1 = logits[1:2, :]
    m = jnp.maximum(l0, l1)
    lse = m + jnp.log(jnp.exp(l0 - m) + jnp.exp(l1 - m))                # [1, bt]
    out_ref[...] = logits - lse


# ---------------- params ----------------
def init_params(key):
    """Parameters matching the PyTorch Net module (f32)."""
    keys = jax.random.split(key, 12)
    embs = []
    for i, n in enumerate(EMB_VOCABS):
        t = jax.random.normal(keys[i], (n, 8), jnp.float32)
        t = t.at[0].set(0.0)                        # padding_idx=0 -> zero row
        embs.append(t)

    def linear(kw, kb, fan_in, fan_out):
        bound = 1.0 / float(fan_in) ** 0.5
        w = jax.random.uniform(kw, (fan_in, fan_out), jnp.float32, -bound, bound)
        b = jax.random.uniform(kb, (fan_out,), jnp.float32, -bound, bound)
        return w, b

    w1, b1 = linear(keys[6], keys[7], 53, 100)
    w2, b2 = linear(keys[8], keys[9], 100, 50)
    w3, b3 = linear(keys[10], keys[11], 57, 2)
    return {"emb": embs, "w1": w1, "b1": b1, "w2": w2, "b2": b2, "w3": w3, "b3": b3}


def prepare_kernel_params(p):
    """Pack / fuse / zero-pad params ONCE into the kernel's MXU-friendly layout."""
    # stacked embedding matrix E [48, 90]: block-diagonal of the 6 tables (transposed)
    emb_stack = jnp.zeros((48, TOTAL_VOCAB), jnp.float32)
    for f, (off, voc) in enumerate(zip(EMB_OFFSETS, EMB_VOCABS)):
        emb_stack = emb_stack.at[8 * f:8 * f + 8, off:off + voc].set(p["emb"][f].T)

    # fuse gather into linear1: (W1_emb.T [100,48]) @ E [48,90] -> [100,90], pad to [128,128]
    w1e = jnp.zeros((H1_PAD, SEL_ROWS), jnp.float32)
    w1e = w1e.at[:100, :TOTAL_VOCAB].set(p["w1"][:48, :].T @ emb_stack)
    w1e = w1e.astype(jnp.bfloat16)

    # raw integer deep columns keep an exact f32 path
    w1r = jnp.zeros((H1_PAD, RAW_PAD), jnp.float32)
    w1r = w1r.at[:100, :NUM_RAW_DEEP].set(p["w1"][48:53, :].T)

    w2_t = jnp.zeros((H2_PAD, H1_PAD), jnp.float32)
    w2_t = w2_t.at[:50, :100].set(p["w2"].T).astype(jnp.bfloat16)

    # linear3 split: deep part over h2 (rows 0:50), wide part over x[:,0:7] (f32)
    w3d = jnp.zeros((NUM_CLASSES, H2_PAD), jnp.float32)
    w3d = w3d.at[:, 0:50].set(p["w3"][7:57, :].T)
    w3w = jnp.zeros((NUM_CLASSES, WIDE_PAD), jnp.float32)
    w3w = w3w.at[:, 0:NUM_WIDE].set(p["w3"][0:7, :].T)

    bias = jnp.zeros((H1_PAD, 3), jnp.float32)          # packed b1 | b2 | b3 columns
    bias = bias.at[:100, 0].set(p["b1"])
    bias = bias.at[:50, 1].set(p["b2"])
    bias = bias.at[:NUM_CLASSES, 2].set(p["b3"])
    return {"w1e": w1e, "w1r": w1r, "w2": w2_t, "w3d": w3d, "w3w": w3w, "bias": bias}


# ---------------- wrapper ----------------
@functools.partial(jax.jit, static_argnames=("b_tile",))
def net_forward(x, kparams, *, b_tile=2048):
    """Forward pass of Net; x is [B, 21] int, returns [B, 2] f32 log-probs."""
    B, F = x.shape
    bt, b_pad = _choose_tile(B, b_tile)

    # feature-major layout: pad to 24 feature rows and b_pad batch columns
    # (index 0 is valid for every embedding table; padded rows are sliced off below)
    x_t = jnp.pad(x.astype(jnp.int32), ((0, b_pad - B), (0, X_ROWS - F))).T   # [24, b_pad]

    out_t = pl.pallas_call(
        wide_deep_kernel,
        out_shape=jax.ShapeDtypeStruct((NUM_CLASSES, b_pad), jnp.float32),
        grid_spec=pltpu.PrefetchScalarGridSpec(
            num_scalar_prefetch=0,
            grid=(b_pad // bt,),
            in_specs=[
                pl.BlockSpec((X_ROWS, bt), lambda i: (0, i)),                # streamed activations
                pl.BlockSpec((H1_PAD, SEL_ROWS), lambda i: (0, 0)),          # weights stay VMEM-resident
                pl.BlockSpec((H1_PAD, RAW_PAD), lambda i: (0, 0)),
                pl.BlockSpec((H2_PAD, H1_PAD), lambda i: (0, 0)),
                pl.BlockSpec((NUM_CLASSES, H2_PAD), lambda i: (0, 0)),
                pl.BlockSpec((NUM_CLASSES, WIDE_PAD), lambda i: (0, 0)),
                pl.BlockSpec((H1_PAD, 3), lambda i: (0, 0)),
            ],
            out_specs=pl.BlockSpec((NUM_CLASSES, bt), lambda i: (0, i)),
        ),
        compiler_params=pltpu.CompilerParams(
            # batch tiles are independent -> shard across v7x's 2 TensorCores
            dimension_semantics=("parallel",),
        ),
    )(x_t, kparams["w1e"], kparams["w1r"], kparams["w2"],
      kparams["w3d"], kparams["w3w"], kparams["bias"])

    return out_t[:, :B].T                                                    # [B, 2]


# ---------------- pure-JAX reference (mirrors the PyTorch forward) ----------------
def net_reference(x, p):
    wide = x[:, 0:7].astype(jnp.float32)
    embs = [jnp.take(p["emb"][i], x[:, 10 + i], axis=0) for i in range(6)]
    x7 = x[:, 16:21].astype(jnp.float32)
    deep = jnp.concatenate(embs + [x7], axis=1)
    h1 = jax.nn.relu(deep @ p["w1"] + p["b1"])
    h2 = jax.nn.relu(h1 @ p["w2"] + p["b2"])
    logits = jnp.concatenate([wide, h2], axis=1) @ p["w3"] + p["b3"]
    return jax.nn.log_softmax(logits, axis=-1)


if __name__ == "__main__":
    key = jax.random.PRNGKey(0)
    kx, kp = jax.random.split(key)

    B = 200                              # exercises batch padding + a 2-step parallel grid
    x = jax.random.randint(kx, (B, 21), 0, 10, dtype=jnp.int32)
    for i, n in enumerate(EMB_VOCABS):   # clamp embedding-index columns to their vocabs
        x = x.at[:, 10 + i].set(x[:, 10 + i] % n)

    params = init_params(kp)
    kparams = prepare_kernel_params(params)

    out = net_forward(x, kparams)        # default b_tile=2048 -> bt=128, grid=(2,)
    out = jax.block_until_ready(out)
    assert out.shape == (B, 2) and out.dtype == jnp.float32

    ref = net_reference(x, params)
    err = float(jnp.max(jnp.abs(out - ref)))
    assert err < 0.1, f"mismatch vs reference: max abs err {err}"   # bf16-MXU tolerance
    print("KERNEL_OK")
</pallas_src>

<mosaic_0001>
module attributes {stable_mosaic.version = 11 : i64} {
  func.func @wide_deep_kernel(%arg0: i32, %arg1: memref<24x128xi32, #tpu.memory_space<vmem>>, %arg2: memref<128x128xbf16, #tpu.memory_space<vmem>>, %arg3: memref<128x8xf32, #tpu.memory_space<vmem>>, %arg4: memref<64x128xbf16, #tpu.memory_space<vmem>>, %arg5: memref<2x64xf32, #tpu.memory_space<vmem>>, %arg6: memref<2x8xf32, #tpu.memory_space<vmem>>, %arg7: memref<128x3xf32, #tpu.memory_space<vmem>>, %arg8: memref<2x128xf32, #tpu.memory_space<vmem>>) attributes {dimension_semantics = [#tpu.dimension_semantics<parallel>], iteration_bounds = array<i64: 2>, scalar_prefetch = 0 : i64, scratch_operands = 0 : i64, tpu.core_type = #tpu.core_type<tc>, window_params = [{transform_indices = @transform_0, window_bounds = array<i64: 24, 128>}, {pipeline_mode = #tpu.pipeline_mode<synchronous>, transform_indices = @transform_1, window_bounds = array<i64: 128, 128>}, {pipeline_mode = #tpu.pipeline_mode<synchronous>, transform_indices = @transform_2, window_bounds = array<i64: 128, 8>}, {pipeline_mode = #tpu.pipeline_mode<synchronous>, transform_indices = @transform_3, window_bounds = array<i64: 64, 128>}, {pipeline_mode = #tpu.pipeline_mode<synchronous>, transform_indices = @transform_4, window_bounds = array<i64: 2, 64>}, {pipeline_mode = #tpu.pipeline_mode<synchronous>, transform_indices = @transform_5, window_bounds = array<i64: 2, 8>}, {pipeline_mode = #tpu.pipeline_mode<synchronous>, transform_indices = @transform_6, window_bounds = array<i64: 128, 3>}, {transform_indices = @transform_7, window_bounds = array<i64: 2, 128>}]} {
    %c0 = arith.constant 0 : index
    %c0_0 = arith.constant 0 : index
    %0 = vector.load %arg1[%c0, %c0_0] : memref<24x128xi32, #tpu.memory_space<vmem>>, vector<24x128xi32>
    %1 = vector.extract_strided_slice %0 {offsets = [0, 0], sizes = [8, 128], strides = [1, 1]} : vector<24x128xi32> to vector<8x128xi32>
    %2 = arith.sitofp %1 : vector<8x128xi32> to vector<8x128xf32>
    %3 = vector.extract_strided_slice %0 {offsets = [16, 0], sizes = [8, 128], strides = [1, 1]} : vector<24x128xi32> to vector<8x128xi32>
    %4 = arith.sitofp %3 : vector<8x128xi32> to vector<8x128xf32>
    %5 = tpu.iota {dimensions = array<i32: 0>} : vector<128x128xi32>
    %6 = vector.extract_strided_slice %0 {offsets = [10, 0], sizes = [1, 128], strides = [1, 1]} : vector<24x128xi32> to vector<1x128xi32>
    %c0_i32 = arith.constant 0 : i32
    %7 = vector.broadcast %c0_i32 : i32 to vector<1x128xi32>
    %8 = arith.cmpi sge, %6, %7 : vector<1x128xi32>
    %c9_i32 = arith.constant 9 : i32
    %9 = vector.broadcast %c9_i32 : i32 to vector<1x128xi32>
    %10 = arith.cmpi slt, %6, %9 : vector<1x128xi32>
    %11 = arith.andi %8, %10 : vector<1x128xi1>
    %c0_i32_1 = arith.constant 0 : i32
    %12 = vector.broadcast %c0_i32_1 : i32 to vector<1x128xi32>
    %13 = arith.addi %6, %12 : vector<1x128xi32>
    %c-1_i32 = arith.constant -1 : i32
    %14 = vector.broadcast %c-1_i32 : i32 to vector<1x128xi32>
    %15 = arith.select %11, %13, %14 : vector<1x128xi1>, vector<1x128xi32>
    %16 = vector.broadcast %15 : vector<1x128xi32> to vector<128x128xi32>
    %17 = arith.cmpi eq, %5, %16 : vector<128x128xi32>
    %18 = vector.extract_strided_slice %0 {offsets = [11, 0], sizes = [1, 128], strides = [1, 1]} : vector<24x128xi32> to vector<1x128xi32>
    %c0_i32_2 = arith.constant 0 : i32
    %19 = vector.broadcast %c0_i32_2 : i32 to vector<1x128xi32>
    %20 = arith.cmpi sge, %18, %19 : vector<1x128xi32>
    %c16_i32 = arith.constant 16 : i32
    %21 = vector.broadcast %c16_i32 : i32 to vector<1x128xi32>
    %22 = arith.cmpi slt, %18, %21 : vector<1x128xi32>
    %23 = arith.andi %20, %22 : vector<1x128xi1>
    %c9_i32_3 = arith.constant 9 : i32
    %24 = vector.broadcast %c9_i32_3 : i32 to vector<1x128xi32>
    %25 = arith.addi %18, %24 : vector<1x128xi32>
    %c-1_i32_4 = arith.constant -1 : i32
    %26 = vector.broadcast %c-1_i32_4 : i32 to vector<1x128xi32>
    %27 = arith.select %23, %25, %26 : vector<1x128xi1>, vector<1x128xi32>
    %28 = vector.broadcast %27 : vector<1x128xi32> to vector<128x128xi32>
    %29 = arith.cmpi eq, %5, %28 : vector<128x128xi32>
    %30 = arith.ori %17, %29 : vector<128x128xi1>
    %31 = vector.extract_strided_slice %0 {offsets = [12, 0], sizes = [1, 128], strides = [1, 1]} : vector<24x128xi32> to vector<1x128xi32>
    %c0_i32_5 = arith.constant 0 : i32
    %32 = vector.broadcast %c0_i32_5 : i32 to vector<1x128xi32>
    %33 = arith.cmpi sge, %31, %32 : vector<1x128xi32>
    %c2_i32 = arith.constant 2 : i32
    %34 = vector.broadcast %c2_i32 : i32 to vector<1x128xi32>
    %35 = arith.cmpi slt, %31, %34 : vector<1x128xi32>
    %36 = arith.andi %33, %35 : vector<1x128xi1>
    %c25_i32 = arith.constant 25 : i32
    %37 = vector.broadcast %c25_i32 : i32 to vector<1x128xi32>
    %38 = arith.addi %31, %37 : vector<1x128xi32>
    %c-1_i32_6 = arith.constant -1 : i32
    %39 = vector.broadcast %c-1_i32_6 : i32 to vector<1x128xi32>
    %40 = arith.select %36, %38, %39 : vector<1x128xi1>, vector<1x128xi32>
    %41 = vector.broadcast %40 : vector<1x128xi32> to vector<128x128xi32>
    %42 = arith.cmpi eq, %5, %41 : vector<128x128xi32>
    %43 = arith.ori %30, %42 : vector<128x128xi1>
    %44 = vector.extract_strided_slice %0 {offsets = [13, 0], sizes = [1, 128], strides = [1, 1]} : vector<24x128xi32> to vector<1x128xi32>
    %c0_i32_7 = arith.constant 0 : i32
    %45 = vector.broadcast %c0_i32_7 : i32 to vector<1x128xi32>
    %46 = arith.cmpi sge, %44, %45 : vector<1x128xi32>
    %c6_i32 = arith.constant 6 : i32
    %47 = vector.broadcast %c6_i32 : i32 to vector<1x128xi32>
    %48 = arith.cmpi slt, %44, %47 : vector<1x128xi32>
    %49 = arith.andi %46, %48 : vector<1x128xi1>
    %c27_i32 = arith.constant 27 : i32
    %50 = vector.broadcast %c27_i32 : i32 to vector<1x128xi32>
    %51 = arith.addi %44, %50 : vector<1x128xi32>
    %c-1_i32_8 = arith.constant -1 : i32
    %52 = vector.broadcast %c-1_i32_8 : i32 to vector<1x128xi32>
    %53 = arith.select %49, %51, %52 : vector<1x128xi1>, vector<1x128xi32>
    %54 = vector.broadcast %53 : vector<1x128xi32> to vector<128x128xi32>
    %55 = arith.cmpi eq, %5, %54 : vector<128x128xi32>
    %56 = arith.ori %43, %55 : vector<128x128xi1>
    %57 = vector.extract_strided_slice %0 {offsets = [14, 0], sizes = [1, 128], strides = [1, 1]} : vector<24x128xi32> to vector<1x128xi32>
    %c0_i32_9 = arith.constant 0 : i32
    %58 = vector.broadcast %c0_i32_9 : i32 to vector<1x128xi32>
    %59 = arith.cmpi sge, %57, %58 : vector<1x128xi32>
    %c42_i32 = arith.constant 42 : i32
    %60 = vector.broadcast %c42_i32 : i32 to vector<1x128xi32>
    %61 = arith.cmpi slt, %57, %60 : vector<1x128xi32>
    %62 = arith.andi %59, %61 : vector<1x128xi1>
    %c33_i32 = arith.constant 33 : i32
    %63 = vector.broadcast %c33_i32 : i32 to vector<1x128xi32>
    %64 = arith.addi %57, %63 : vector<1x128xi32>
    %c-1_i32_10 = arith.constant -1 : i32
    %65 = vector.broadcast %c-1_i32_10 : i32 to vector<1x128xi32>
    %66 = arith.select %62, %64, %65 : vector<1x128xi1>, vector<1x128xi32>
    %67 = vector.broadcast %66 : vector<1x128xi32> to vector<128x128xi32>
    %68 = arith.cmpi eq, %5, %67 : vector<128x128xi32>
    %69 = arith.ori %56, %68 : vector<128x128xi1>
    %70 = vector.extract_strided_slice %0 {offsets = [15, 0], sizes = [1, 128], strides = [1, 1]} : vector<24x128xi32> to vector<1x128xi32>
    %c0_i32_11 = arith.constant 0 : i32
    %71 = vector.broadcast %c0_i32_11 : i32 to vector<1x128xi32>
    %72 = arith.cmpi sge, %70, %71 : vector<1x128xi32>
    %c15_i32 = arith.constant 15 : i32
    %73 = vector.broadcast %c15_i32 : i32 to vector<1x128xi32>
    %74 = arith.cmpi slt, %70, %73 : vector<1x128xi32>
    %75 = arith.andi %72, %74 : vector<1x128xi1>
    %c75_i32 = arith.constant 75 : i32
    %76 = vector.broadcast %c75_i32 : i32 to vector<1x128xi32>
    %77 = arith.addi %70, %76 : vector<1x128xi32>
    %c-1_i32_12 = arith.constant -1 : i32
    %78 = vector.broadcast %c-1_i32_12 : i32 to vector<1x128xi32>
    %79 = arith.select %75, %77, %78 : vector<1x128xi1>, vector<1x128xi32>
    %80 = vector.broadcast %79 : vector<1x128xi32> to vector<128x128xi32>
    %81 = arith.cmpi eq, %5, %80 : vector<128x128xi32>
    %82 = arith.ori %69, %81 : vector<128x128xi1>
    %83 = arith.extui %82 : vector<128x128xi1> to vector<128x128xi32>
    %84 = arith.sitofp %83 : vector<128x128xi32> to vector<128x128xf32>
    %85 = arith.truncf %84 : vector<128x128xf32> to vector<128x128xbf16>
    %c0_13 = arith.constant 0 : index
    %c0_14 = arith.constant 0 : index
    %86 = vector.load %arg2[%c0_13, %c0_14] : memref<128x128xbf16, #tpu.memory_space<vmem>>, vector<128x128xbf16>
    %cst = arith.constant dense<0.000000e+00> : vector<128x128xf32>
    %87 = tpu.matmul %86, %85, %cst {dimension_numbers = #tpu.dot_dimension_numbers<[1], [0], [0], [1], [0, 0, 1, 1], [], []>} : vector<128x128xbf16>, vector<128x128xbf16>, vector<128x128xf32> -> vector<128x128xf32>
    %c0_15 = arith.constant 0 : index
    %c0_16 = arith.constant 0 : index
    %88 = vector.load %arg3[%c0_15, %c0_16] : memref<128x8xf32, #tpu.memory_space<vmem>>, vector<128x8xf32>
    %cst_17 = arith.constant dense<0.000000e+00> : vector<128x128xf32>
    %89 = tpu.matmul %88, %4, %cst_17 {dimension_numbers = #tpu.dot_dimension_numbers<[1], [0], [0], [1], [0, 0, 1, 1], [], []>} : vector<128x8xf32>, vector<8x128xf32>, vector<128x128xf32> -> vector<128x128xf32>
    %90 = arith.addf %87, %89 : vector<128x128xf32>
    %c0_18 = arith.constant 0 : index
    %c0_19 = arith.constant 0 : index
    %91 = vector.load %arg7[%c0_18, %c0_19] : memref<128x3xf32, #tpu.memory_space<vmem>>, vector<128x1xf32>
    %92 = vector.broadcast %91 : vector<128x1xf32> to vector<128x128xf32>
    %93 = arith.addf %90, %92 : vector<128x128xf32>
    %cst_20 = arith.constant 0.000000e+00 : f32
    %94 = vector.broadcast %cst_20 : f32 to vector<128x128xf32>
    %95 = arith.maximumf %93, %94 : vector<128x128xf32>
    %c0_21 = arith.constant 0 : index
    %c0_22 = arith.constant 0 : index
    %96 = vector.load %arg4[%c0_21, %c0_22] : memref<64x128xbf16, #tpu.memory_space<vmem>>, vector<64x128xbf16>
    %97 = arith.truncf %95 : vector<128x128xf32> to vector<128x128xbf16>
    %cst_23 = arith.constant dense<0.000000e+00> : vector<64x128xf32>
    %98 = tpu.matmul %96, %97, %cst_23 {dimension_numbers = #tpu.dot_dimension_numbers<[1], [0], [0], [1], [0, 0, 1, 1], [], []>} : vector<64x128xbf16>, vector<128x128xbf16>, vector<64x128xf32> -> vector<64x128xf32>
    %c0_24 = arith.constant 0 : index
    %c1 = arith.constant 1 : index
    %99 = vector.load %arg7[%c0_24, %c1] : memref<128x3xf32, #tpu.memory_space<vmem>>, vector<64x1xf32>
    %100 = vector.broadcast %99 : vector<64x1xf32> to vector<64x128xf32>
    %101 = arith.addf %98, %100 : vector<64x128xf32>
    %cst_25 = arith.constant 0.000000e+00 : f32
    %102 = vector.broadcast %cst_25 : f32 to vector<64x128xf32>
    %103 = arith.maximumf %101, %102 : vector<64x128xf32>
    %c0_26 = arith.constant 0 : index
    %c0_27 = arith.constant 0 : index
    %104 = vector.load %arg5[%c0_26, %c0_27] : memref<2x64xf32, #tpu.memory_space<vmem>>, vector<2x64xf32>
    %cst_28 = arith.constant dense<0.000000e+00> : vector<2x128xf32>
    %105 = tpu.matmul %104, %103, %cst_28 {dimension_numbers = #tpu.dot_dimension_numbers<[1], [0], [0], [1], [0, 0, 1, 1], [], []>} : vector<2x64xf32>, vector<64x128xf32>, vector<2x128xf32> -> vector<2x128xf32>
    %c0_29 = arith.constant 0 : index
    %c0_30 = arith.constant 0 : index
    %106 = vector.load %arg6[%c0_29, %c0_30] : memref<2x8xf32, #tpu.memory_space<vmem>>, vector<2x8xf32>
    %cst_31 = arith.constant dense<0.000000e+00> : vector<2x128xf32>
    %107 = tpu.matmul %106, %2, %cst_31 {dimension_numbers = #tpu.dot_dimension_numbers<[1], [0], [0], [1], [0, 0, 1, 1], [], []>} : vector<2x8xf32>, vector<8x128xf32>, vector<2x128xf32> -> vector<2x128xf32>
    %108 = arith.addf %105, %107 : vector<2x128xf32>
    %c0_32 = arith.constant 0 : index
    %c2 = arith.constant 2 : index
    %109 = vector.load %arg7[%c0_32, %c2] : memref<128x3xf32, #tpu.memory_space<vmem>>, vector<2x1xf32>
    %110 = vector.broadcast %109 : vector<2x1xf32> to vector<2x128xf32>
    %111 = arith.addf %108, %110 : vector<2x128xf32>
    %112 = vector.extract_strided_slice %111 {offsets = [0, 0], sizes = [1, 128], strides = [1, 1]} : vector<2x128xf32> to vector<1x128xf32>
    %113 = vector.extract_strided_slice %111 {offsets = [1, 0], sizes = [1, 128], strides = [1, 1]} : vector<2x128xf32> to vector<1x128xf32>
    %114 = arith.maximumf %112, %113 : vector<1x128xf32>
    %115 = arith.subf %112, %114 : vector<1x128xf32>
    %116 = math.exp %115 : vector<1x128xf32>
    %117 = arith.subf %113, %114 : vector<1x128xf32>
    %118 = math.exp %117 : vector<1x128xf32>
    %119 = arith.addf %116, %118 : vector<1x128xf32>
    %120 = math.log %119 : vector<1x128xf32>
    %121 = arith.addf %114, %120 : vector<1x128xf32>
    %122 = vector.broadcast %121 : vector<1x128xf32> to vector<2x128xf32>
    %123 = arith.subf %111, %122 : vector<2x128xf32>
    %c0_33 = arith.constant 0 : index
    %c0_34 = arith.constant 0 : index
    %124 = vector.load %arg8[%c0_33, %c0_34] : memref<2x128xf32, #tpu.memory_space<vmem>>, vector<2x128xf32>
    tpu.vector_store %arg8[%c0_33, %c0_34], %123 {strides = array<i32>} : memref<2x128xf32, #tpu.memory_space<vmem>>, vector<2x128xf32>,
    return
  }
  func.func @transform_0(%arg0: i32) -> (i32, i32) {
    %c0_i32 = arith.constant 0 : i32
    %c0_i32_0 = arith.constant 0 : i32
    return %c0_i32, %arg0 : i32, i32
  }
  func.func @transform_1(%arg0: i32) -> (i32, i32) {
    %c0_i32 = arith.constant 0 : i32
    %c0_i32_0 = arith.constant 0 : i32
    %c0_i32_1 = arith.constant 0 : i32
    return %c0_i32, %c0_i32_0 : i32, i32
  }
  func.func @transform_2(%arg0: i32) -> (i32, i32) {
    %c0_i32 = arith.constant 0 : i32
    %c0_i32_0 = arith.constant 0 : i32
    %c0_i32_1 = arith.constant 0 : i32
    return %c0_i32, %c0_i32_0 : i32, i32
  }
  func.func @transform_3(%arg0: i32) -> (i32, i32) {
    %c0_i32 = arith.constant 0 : i32
    %c0_i32_0 = arith.constant 0 : i32
    %c0_i32_1 = arith.constant 0 : i32
    return %c0_i32, %c0_i32_0 : i32, i32
  }
  func.func @transform_4(%arg0: i32) -> (i32, i32) {
    %c0_i32 = arith.constant 0 : i32
    %c0_i32_0 = arith.constant 0 : i32
    %c0_i32_1 = arith.constant 0 : i32
    return %c0_i32, %c0_i32_0 : i32, i32
  }
  func.func @transform_5(%arg0: i32) -> (i32, i32) {
    %c0_i32 = arith.constant 0 : i32
    %c0_i32_0 = arith.constant 0 : i32
    %c0_i32_1 = arith.constant 0 : i32
    return %c0_i32, %c0_i32_0 : i32, i32
  }
  func.func @transform_6(%arg0: i32) -> (i32, i32) {
    %c0_i32 = arith.constant 0 : i32
    %c0_i32_0 = arith.constant 0 : i32
    %c0_i32_1 = arith.constant 0 : i32
    return %c0_i32, %c0_i32_0 : i32, i32
  }
  func.func @transform_7(%arg0: i32) -> (i32, i32) {
    %c0_i32 = arith.constant 0 : i32
    %c0_i32_0 = arith.constant 0 : i32
    return %c0_i32, %arg0 : i32, i32
  }
}

</mosaic_0001>

<llo_original>
// kernel: net_forward.1
$region0: #{net_forward.1}
  #allocation0 [shape = 'u32[]', space=smem, size = 0x4, offset = 0x4, fixed_abs, tag = 'smem constant byte address 0x4 - core index']
  #allocation1 [shape = 'u32[144,128]{1,0:T(1,128)}', space=vmem, size = 0x12000, scoped, tag = 'internal scratch']
  %s0 = inlined_call_operand.vmem [shape: s32[24,256], index: 0, kind: input, shape index: {}]
  %s1 = inlined_call_operand.vmem [shape: bf16[128,128], index: 1, kind: input, shape index: {}]
  %s2 = inlined_call_operand.vmem [shape: f32[128,8], index: 2, kind: input, shape index: {}]
  %s3 = inlined_call_operand.vmem [shape: bf16[64,128], index: 3, kind: input, shape index: {}]
  %s4 = inlined_call_operand.vmem [shape: f32[2,64], index: 4, kind: input, shape index: {}]
  %s5 = inlined_call_operand.vmem [shape: f32[2,8], index: 5, kind: input, shape index: {}]
  %s6 = inlined_call_operand.vmem [shape: f32[128,3], index: 6, kind: input, shape index: {}]
  %s7 = inlined_call_operand.vmem [shape: f32[2,256], index: 7, kind: output, shape index: {}]
  %s8 = sld [smem:[#allocation0]]
  $region99: #{net_forward.1} parent=0
    _
  %s10 = ssub.s32 1, %s8
  %s11 = scalar_select 0, %s10, %s8
  $region1: #{net_forward.1} parent=0
    #allocation2 [shape = 'u8[24576]{0}', space=vmem, size = 0x6000, scoped, tag = 'input window, operand 0']
    loop: start=0, step=1, limit=4
    $region2: #{net_forward.1} parent=1 // loop_pre_header
      _
    $region3: #{net_forward.1} parent=1 // loop_header
      %s13 = sphi 0, %s17
      %p14 = scmp.ge.s32.totalorder %s13, 4
      %s23 = sphi 0, %s25
      %s26 = sphi 0, %s23
      %s27 = sphi 0, %s26
      %s43 = sphi 0, %s27
      %s47 = sphi 0, %s47
      %s49 = sphi 0, %s47
      %s50 = sphi 0, %s49
      %s64 = sphi 0, %s50
      %s68 = sphi 0, %s68
      %s70 = sphi 0, %s68
      %s71 = sphi 0, %s70
      %s85 = sphi 0, %s71
      %s89 = sphi 0, %s89
      %s91 = sphi 0, %s89
      %s92 = sphi 0, %s91
      %s106 = sphi 0, %s92
      %s110 = sphi 0, %s110
      %s112 = sphi 0, %s110
      %s113 = sphi 0, %s112
      %s127 = sphi 0, %s113
      %s131 = sphi 0, %s131
      %s133 = sphi 0, %s131
      %s134 = sphi 0, %s133
      %s148 = sphi 0, %s134
      %s152 = sphi 0, %s152
      %s154 = sphi 0, %s152
      %s155 = sphi 0, %s154
      %s169 = sphi 0, %s155
      %s175 = sphi 0, %s177
      %s178 = sphi 0, %s175
      %s179 = sphi 0, %s178
      %s195 = sphi 0, %s179
    $region4: #{net_forward.1} parent=1 // loop_header_branch
      %16 = sbr.rel (%p14) target = $region8
    $region5: #{net_forward.1} parent=1 // loop_body
      %s18 = ssub.s32 %s13, 1
      %s19 = ssub.s32 %s13, 2
      %s20 = sadd.s32 %s13, 1
      %s21 = ssub.s32 %s13, %s20
      %p22 = scmp.eq.s32.totalorder %s21, 0
      %s24 = sadd.s32 %s23, 1
      %s25 = scalar_select %p22, %s23, %s24
      %p28 = pneg %p22
      %p29 = scmp.eq.s32.totalorder %s13, 1
      %p30 = por %p28, %p29
      %p31 = scmp.ne.s32.totalorder %s23, %s26
      %p32 = scmp.eq.s32.totalorder %s13, 0
      %p33 = por %p31, %p32
      %p34 = scmp.ne.s32.totalorder %s23, %s26
      %p35 = scmp.eq.s32.totalorder %s18, 1
      %p36 = por %p34, %p35
      %p37 = scmp.ne.s32.totalorder %s26, %s27
      %p38 = scmp.eq.s32.totalorder %s18, 0
      %p39 = por %p37, %p38
      %p40 = scmp.ne.s32.totalorder %s26, %s27
      %p41 = scmp.eq.s32.totalorder %s19, 1
      %p42 = por %p40, %p41
      %p44 = scmp.ne.s32.totalorder %s27, %s43
      %p45 = scmp.eq.s32.totalorder %s19, 0
      %p46 = por %p44, %p45
      %s48 = sadd.s32 %s47, 1
      %p51 = scmp.eq.s32.totalorder %s13, 1
      %p52 = scmp.ne.s32.totalorder %s47, %s49
      %p53 = scmp.eq.s32.totalorder %s13, 0
      %p54 = por %p52, %p53
      %p55 = scmp.ne.s32.totalorder %s47, %s49
      %p56 = scmp.eq.s32.totalorder %s18, 1
      %p57 = por %p55, %p56
      %p58 = scmp.ne.s32.totalorder %s49, %s50
      %p59 = scmp.eq.s32.totalorder %s18, 0
      %p60 = por %p58, %p59
      %p61 = scmp.ne.s32.totalorder %s49, %s50
      %p62 = scmp.eq.s32.totalorder %s19, 1
      %p63 = por %p61, %p62
      %p65 = scmp.ne.s32.totalorder %s50, %s64
      %p66 = scmp.eq.s32.totalorder %s19, 0
      %p67 = por %p65, %p66
      %s69 = sadd.s32 %s68, 1
      %p72 = scmp.eq.s32.totalorder %s13, 1
      %p73 = scmp.ne.s32.totalorder %s68, %s70
      %p74 = scmp.eq.s32.totalorder %s13, 0
      %p75 = por %p73, %p74
      %p76 = scmp.ne.s32.totalorder %s68, %s70
      %p77 = scmp.eq.s32.totalorder %s18, 1
      %p78 = por %p76, %p77
      %p79 = scmp.ne.s32.totalorder %s70, %s71
      %p80 = scmp.eq.s32.totalorder %s18, 0
      %p81 = por %p79, %p80
      %p82 = scmp.ne.s32.totalorder %s70, %s71
      %p83 = scmp.eq.s32.totalorder %s19, 1
      %p84 = por %p82, %p83
      %p86 = scmp.ne.s32.totalorder %s71, %s85
      %p87 = scmp.eq.s32.totalorder %s19, 0
      %p88 = por %p86, %p87
      %s90 = sadd.s32 %s89, 1
      %p93 = scmp.eq.s32.totalorder %s13, 1
      %p94 = scmp.ne.s32.totalorder %s89, %s91
      %p95 = scmp.eq.s32.totalorder %s13, 0
      %p96 = por %p94, %p95
      %p97 = scmp.ne.s32.totalorder %s89, %s91
      %p98 = scmp.eq.s32.totalorder %s18, 1
      %p99 = por %p97, %p98
      %p100 = scmp.ne.s32.totalorder %s91, %s92
      %p101 = scmp.eq.s32.totalorder %s18, 0
      %p102 = por %p100, %p101
      %p103 = scmp.ne.s32.totalorder %s91, %s92
      %p104 = scmp.eq.s32.totalorder %s19, 1
      %p105 = por %p103, %p104
      %p107 = scmp.ne.s32.totalorder %s92, %s106
      %p108 = scmp.eq.s32.totalorder %s19, 0
      %p109 = por %p107, %p108
      %s111 = sadd.s32 %s110, 1
      %p114 = scmp.eq.s32.totalorder %s13, 1
      %p115 = scmp.ne.s32.totalorder %s110, %s112
      %p116 = scmp.eq.s32.totalorder %s13, 0
      %p117 = por %p115, %p116
      %p118 = scmp.ne.s32.totalorder %s110, %s112
      %p119 = scmp.eq.s32.totalorder %s18, 1
      %p120 = por %p118, %p119
      %p121 = scmp.ne.s32.totalorder %s112, %s113
      %p122 = scmp.eq.s32.totalorder %s18, 0
      %p123 = por %p121, %p122
      %p124 = scmp.ne.s32.totalorder %s112, %s113
      %p125 = scmp.eq.s32.totalorder %s19, 1
      %p126 = por %p124, %p125
      %p128 = scmp.ne.s32.totalorder %s113, %s127
      %p129 = scmp.eq.s32.totalorder %s19, 0
      %p130 = por %p128, %p129
      %s132 = sadd.s32 %s131, 1
      %p135 = scmp.eq.s32.totalorder %s13, 1
      %p136 = scmp.ne.s32.totalorder %s131, %s133
      %p137 = scmp.eq.s32.totalorder %s13, 0
      %p138 = por %p136, %p137
      %p139 = scmp.ne.s32.totalorder %s131, %s133
      %p140 = scmp.eq.s32.totalorder %s18, 1
      %p141 = por %p139, %p140
      %p142 = scmp.ne.s32.totalorder %s133, %s134
      %p143 = scmp.eq.s32.totalorder %s18, 0
      %p144 = por %p142, %p143
      %p145 = scmp.ne.s32.totalorder %s133, %s134
      %p146 = scmp.eq.s32.totalorder %s19, 1
      %p147 = por %p145, %p146
      %p149 = scmp.ne.s32.totalorder %s134, %s148
      %p150 = scmp.eq.s32.totalorder %s19, 0
      %p151 = por %p149, %p150
      %s153 = sadd.s32 %s152, 1
      %p156 = scmp.eq.s32.totalorder %s13, 1
      %p157 = scmp.ne.s32.totalorder %s152, %s154
      %p158 = scmp.eq.s32.totalorder %s13, 0
      %p159 = por %p157, %p158
      %p160 = scmp.ne.s32.totalorder %s152, %s154
      %p161 = scmp.eq.s32.totalorder %s18, 1
      %p162 = por %p160, %p161
      %p163 = scmp.ne.s32.totalorder %s154, %s155
      %p164 = scmp.eq.s32.totalorder %s18, 0
      %p165 = por %p163, %p164
      %p166 = scmp.ne.s32.totalorder %s154, %s155
      %p167 = scmp.eq.s32.totalorder %s19, 1
      %p168 = por %p166, %p167
      %p170 = scmp.ne.s32.totalorder %s155, %s169
      %p171 = scmp.eq.s32.totalorder %s19, 0
      %p172 = por %p170, %p171
      %s173 = ssub.s32 %s13, %s20
      %p174 = scmp.eq.s32.totalorder %s173, 0
      %s176 = sadd.s32 %s175, 1
      %s177 = scalar_select %p174, %s175, %s176
      %p180 = pneg %p174
      %p181 = scmp.eq.s32.totalorder %s13, 1
      %p182 = por %p180, %p181
      %p183 = scmp.ne.s32.totalorder %s175, %s178
      %p184 = scmp.eq.s32.totalorder %s13, 0
      %p185 = por %p183, %p184
      %p186 = scmp.ne.s32.totalorder %s175, %s178
      %p187 = scmp.eq.s32.totalorder %s18, 1
      %p188 = por %p186, %p187
      %p189 = scmp.ne.s32.totalorder %s178, %s179
      %p190 = scmp.eq.s32.totalorder %s18, 0
      %p191 = por %p189, %p190
      %p192 = scmp.ne.s32.totalorder %s178, %s179
      %p193 = scmp.eq.s32.totalorder %s19, 1
      %p194 = por %p192, %p193
      %p196 = scmp.ne.s32.totalorder %s179, %s195
      %p197 = scmp.eq.s32.totalorder %s19, 0
      %p198 = por %p196, %p197
      %p199 = scmp.le.s32.totalorder 1, %s13
      %p200 = scmp.lt.s32.totalorder %s13, 3
      %p201 = pnand %p199, %p200
      %p202 = pneg %p201
      // Predicated region
      $region9: #{net_forward.1} parent=5 // pred_check
        _
      $region10: #{net_forward.1} parent=5 // pred_check_branch
        %204 = sbr.rel (%p201) target = $region12
      $region11: #{net_forward.1} parent=5 // pred_region
        %s205 = ssub.s32 %s13, 1
        // Predicated region
        $region13: #{net_forward.1} parent=11 // pred_check
          %p206 = pneg %p60
        $region14: #{net_forward.1} parent=11 // pred_check_branch
          %208 = sbr.rel (%p206) target = $region16
        $region15: #{net_forward.1} parent=11 // pred_region
          _
        $region16: #{net_forward.1} parent=11 // pred_fallthru
          _
        // Predicated region
        $region17: #{net_forward.1} parent=11 // pred_check
          %p209 = pneg %p81
        $region18: #{net_forward.1} parent=11 // pred_check_branch
          %211 = sbr.rel (%p209) target = $region20
        $region19: #{net_forward.1} parent=11 // pred_region
          _
        $region20: #{net_forward.1} parent=11 // pred_fallthru
          _
        // Predicated region
        $region21: #{net_forward.1} parent=11 // pred_check
          %p212 = pneg %p102
        $region22: #{net_forward.1} parent=11 // pred_check_branch
          %214 = sbr.rel (%p212) target = $region24
        $region23: #{net_forward.1} parent=11 // pred_region
          _
        $region24: #{net_forward.1} parent=11 // pred_fallthru
          _
        // Predicated region
        $region25: #{net_forward.1} parent=11 // pred_check
          %p215 = pneg %p123
        $region26: #{net_forward.1} parent=11 // pred_check_branch
          %217 = sbr.rel (%p215) target = $region28
        $region27: #{net_forward.1} parent=11 // pred_region
          _
        $region28: #{net_forward.1} parent=11 // pred_fallthru
          _
        // Predicated region
        $region29: #{net_forward.1} parent=11 // pred_check
          %p218 = pneg %p144
        $region30: #{net_forward.1} parent=11 // pred_check_branch
          %220 = sbr.rel (%p218) target = $region32
        $region31: #{net_forward.1} parent=11 // pred_region
          _
        $region32: #{net_forward.1} parent=11 // pred_fallthru
          _
        // Predicated region
        $region33: #{net_forward.1} parent=11 // pred_check
          %p221 = pneg %p165
        $region34: #{net_forward.1} parent=11 // pred_check_branch
          %223 = sbr.rel (%p221) target = $region36
        $region35: #{net_forward.1} parent=11 // pred_region
          _
        $region36: #{net_forward.1} parent=11 // pred_fallthru
          _
      $region12: #{net_forward.1} parent=5 // pred_fallthru
        _
      %p224 = scmp.lt.s32.totalorder %s13, 2
      // Predicated region
      $region37: #{net_forward.1} parent=5 // pred_check
        %p225 = pneg %p224
      $region38: #{net_forward.1} parent=5 // pred_check_branch
        %227 = sbr.rel (%p225) target = $region40
      $region39: #{net_forward.1} parent=5 // pred_region
        // Predicated region
        $region41: #{net_forward.1} parent=39 // pred_check
          %p228 = pneg %p33
        $region42: #{net_forward.1} parent=39 // pred_check_branch
          %230 = sbr.rel (%p228) target = $region44
        $region43: #{net_forward.1} parent=39 // pred_region
          %s231 = sand.u32 %s23, 1
          %s232 = sand.u32 %s23, 1
          %s233 = smul.addr %s232, 24
          %s234 = scalar_lea.vmem [#allocation2], %s233
          %s235 = smul.addr %s13, 8
          %s236 = scalar_lea.vmem %s0, %s235
          // Predicated region
          $region45: #{net_forward.1} parent=43 // pred_check
            _
          $region46: #{net_forward.1} parent=43 // pred_check_branch
            %238 = sbr.rel (0) target = $region48
          $region47: #{net_forward.1} parent=43 // pred_region
            // Predicated region
            $region49: #{net_forward.1} parent=47 // pred_check
              _
            $region50: #{net_forward.1} parent=47 // pred_check_branch
              %240 = sbr.rel (0) target = $region52
            $region51: #{net_forward.1} parent=47 // pred_region
              // Predicated region
              $region64: #{net_forward.1} parent=51 // pred_check
                _
              $region65: #{net_forward.1} parent=51 // pred_check_branch
                %259 = sbr.rel (0) target = $region67
              $region66: #{net_forward.1} parent=51 // pred_region
                loop: start=0, step=1, limit=1
                $region68: #{net_forward.1} parent=66 // loop_pre_header
                  _
                $region69: #{net_forward.1} parent=66 // loop_header
                  %s261 = sphi 0, %s265
                  %p262 = scmp.ge.s32.totalorder %s261, 1
                  %s266 = sphi %s236, %s236
                  %s267 = sphi %s234, %s234
                $region70: #{net_forward.1} parent=66 // loop_header_branch
                  %264 = sbr.rel (%p262) target = $region74
                $region71: #{net_forward.1} parent=66 // loop_body
                  %v268 = vld [vmem:[%s266] sm:$0xff]
                  %269 = vst [vmem:[%s267] sm:$0xff] %v268
                  %v270 = vld [vmem:[%s266 + $0x10] sm:$0xff]
                  %271 = vst [vmem:[%s267 + $0x8] sm:$0xff] %v270
                  %v272 = vld [vmem:[%s266 + $0x20] sm:$0xff]
                  %273 = vst [vmem:[%s267 + $0x10] sm:$0xff] %v272
                $region72: #{net_forward.1} parent=66 // loop_footer
                  %s265 = sadd.s32 1, %s261
                $region73: #{net_forward.1} parent=66 // loop_footer_branch
                  %260 = sbr.rel target = $region69
                $region74: #{net_forward.1} parent=66 // loop_exit
                  _
              $region67: #{net_forward.1} parent=51 // pred_fallthru
                _
              // Predicated region
              $region75: #{net_forward.1} parent=51 // pred_check
                _
              $region76: #{net_forward.1} parent=51 // pred_check_branch
                %275 = sbr.rel target = $region78
              $region77: #{net_forward.1} parent=51 // pred_region
                _
              $region78: #{net_forward.1} parent=51 // pred_fallthru
                _
            $region52: #{net_forward.1} parent=47 // pred_fallthru
              _
            // Predicated region
            $region53: #{net_forward.1} parent=47 // pred_check
              _
            $region54: #{net_forward.1} parent=47 // pred_check_branch
              %242 = sbr.rel target = $region56
            $region55: #{net_forward.1} parent=47 // pred_region
              loop: start=0, step=1, limit=1
              $region57: #{net_forward.1} parent=55 // loop_pre_header
                _
              $region58: #{net_forward.1} parent=55 // loop_header
                %s245 = sphi 0, %s249
                %p246 = scmp.ge.s32.totalorder %s245, 1
                %s250 = sphi %s236, %s236
                %s251 = sphi %s234, %s234
              $region59: #{net_forward.1} parent=55 // loop_header_branch
                %248 = sbr.rel (%p246) target = $region63
              $region60: #{net_forward.1} parent=55 // loop_body
                %v252 = vld [vmem:[%s250] sm:$0xff]
                %253 = vst [vmem:[%s251] sm:$0xff] %v252
                %v254 = vld [vmem:[%s250 + $0x10] sm:$0xff]
                %255 = vst [vmem:[%s251 + $0x8] sm:$0xff] %v254
                %v256 = vld [vmem:[%s250 + $0x20] sm:$0xff]
                %257 = vst [vmem:[%s251 + $0x10] sm:$0xff] %v256
              $region61: #{net_forward.1} parent=55 // loop_footer
                %s249 = sadd.s32 1, %s245
              $region62: #{net_forward.1} parent=55 // loop_footer_branch
                %244 = sbr.rel target = $region58
              $region63: #{net_forward.1} parent=55 // loop_exit
                _
            $region56: #{net_forward.1} parent=47 // pred_fallthru
              _
          $region48: #{net_forward.1} parent=43 // pred_fallthru
            _
          %276 = vnop
        $region44: #{net_forward.1} parent=39 // pred_fallthru
          _
      $region40: #{net_forward.1} parent=5 // pred_fallthru
        _
      %p277 = scmp.le.s32.totalorder 1, %s13
      %p278 = scmp.lt.s32.totalorder %s13, 3
      %p279 = pnand %p277, %p278
      %p280 = pneg %p279
      // Predicated region
      $region79: #{net_forward.1} parent=5 // pred_check
        _
      $region80: #{net_forward.1} parent=5 // pred_check_branch
        %282 = sbr.rel (%p279) target = $region82
      $region81: #{net_forward.1} parent=5 // pred_region
        %s283 = ssub.s32 %s13, 1
        %s284 = sand.u32 %s26, 1
        %s285 = sand.u32 %s26, 1
        %s286 = smul.addr %s285, 24
        %s287 = scalar_lea.vmem [#allocation2], %s286
        // Predicated region
        $region83: #{net_forward.1} parent=81 // pred_check
          %p288 = pneg %p39
        $region84: #{net_forward.1} parent=81 // pred_check_branch
          %290 = sbr.rel (%p288) target = $region86
        $region85: #{net_forward.1} parent=81 // pred_region
          _
        $region86: #{net_forward.1} parent=81 // pred_fallthru
          _
        %s291 = sand.u32 %s26, 1
        %s292 = sand.u32 %s26, 1
        %s293 = smul.addr %s292, 24
        %s294 = scalar_lea.vmem [#allocation2], %s293
        %p295 = pneg %p39
        %p296 = pneg %p36
        %p297 = pneg %p60
        %p298 = pneg %p57
        %p299 = pneg %p81
        %p300 = pneg %p78
        %p301 = pneg %p102
        %p302 = pneg %p99
        %p303 = pneg %p123
        %p304 = pneg %p120
        %p305 = pneg %p144
        %p306 = pneg %p141
        %p307 = pneg %p165
        %p308 = pneg %p162
        %p309 = pneg %p191
        %p310 = pneg %p188
        %p311 = scmp.lt.s32.totalorder %s18, 1
        %s312 = scalar_select %p311, %s18, 1
        %s313 = smul.addr %s312, 2
        %s314 = scalar_lea.vmem %s7, %s313
        %p315 = scmp.lt.s32.totalorder %s18, 1
        %s316 = scalar_select %p315, %s18, 1
        %s317 = smul.addr %s316, 2
        %s318 = scalar_lea.vmem %s7, %s317
        %v320 = vld [vmem:[%s287] sm:$0xff]
        %v321 = vld [vmem:[%s287 + $0x8] sm:$0xff]
        %v322 = vld [vmem:[%s287 + $0x10] sm:$0xff]
        %v323 = vcvt.s32.f32 %v320
        %v324 = vcvt.s32.f32 %v322
        %v325 = vlaneseq
        %v326 = vshrl.u32 %v325, 7
        %v327 = vadd.s32 %v326, 8
        %v328 = vadd.s32 %v326, 16
        %v329 = vadd.s32 %v326, 24
        %v330 = vadd.s32 %v326, 32
        %v331 = vadd.s32 %v326, 40
        %v332 = vadd.s32 %v326, 48
        %v333 = vadd.s32 %v326, 56
        %v334 = vadd.s32 %v326, 64
        %v335 = vadd.s32 %v326, 72
        %v336 = vadd.s32 %v326, 80
        %v337 = vadd.s32 %v326, 88
        %v338 = vadd.s32 %v326, 96
        %v339 = vadd.s32 %v326, 104
        %v340 = vadd.s32 %v326, 112
        %v341 = vadd.s32 %v326, 120
        %vm342 = vcmp.ge.s32.totalorder %v321, 0
        %vm343 = vcmp.lt.s32.totalorder %v321, 9
        %vm344 = vmand %vm342, %vm343
        %v345 = vsel %vm344, %v321, 4294967295
        %v346 = vlaneseq
        %v347 = vshrl.u32 %v346, 7
        %v348 = vsub.s32 2, %v347
        %v349 = vrot.slane %v345, %v348
        %vm350 = vcmp.eq.s32.totalorder %v326, %v349
        %vm351 = vcmp.eq.s32.totalorder %v327, %v349
        %vm352 = vcmp.eq.s32.totalorder %v328, %v349
        %vm353 = vcmp.eq.s32.totalorder %v329, %v349
        %vm354 = vcmp.eq.s32.totalorder %v330, %v349
        %vm355 = vcmp.eq.s32.totalorder %v331, %v349
        %vm356 = vcmp.eq.s32.totalorder %v332, %v349
        %vm357 = vcmp.eq.s32.totalorder %v333, %v349
        %vm358 = vcmp.eq.s32.totalorder %v334, %v349
        %vm359 = vcmp.eq.s32.totalorder %v335, %v349
        %vm360 = vcmp.eq.s32.totalorder %v336, %v349
        %vm361 = vcmp.eq.s32.totalorder %v337, %v349
        %vm362 = vcmp.eq.s32.totalorder %v338, %v349
        %vm363 = vcmp.eq.s32.totalorder %v339, %v349
        %vm364 = vcmp.eq.s32.totalorder %v340, %v349
        %vm365 = vcmp.eq.s32.totalorder %v341, %v349
        %vm366 = vcmp.lt.s32.totalorder %v321, 16
        %vm367 = vmand %vm342, %vm366
        %v368 = vadd.s32 %v321, 9
        %v369 = vsel %vm367, %v368, 4294967295
        %v370 = vlaneseq
        %v371 = vshrl.u32 %v370, 7
        %v372 = vsub.s32 3, %v371
        %v373 = vrot.slane %v369, %v372
        %vm374 = vcmp.eq.s32.totalorder %v326, %v373
        %vm375 = vcmp.eq.s32.totalorder %v327, %v373
        %vm376 = vcmp.eq.s32.totalorder %v328, %v373
        %vm377 = vcmp.eq.s32.totalorder %v329, %v373
        %vm378 = vcmp.eq.s32.totalorder %v330, %v373
        %vm379 = vcmp.eq.s32.totalorder %v331, %v373
        %vm380 = vcmp.eq.s32.totalorder %v332, %v373
        %vm381 = vcmp.eq.s32.totalorder %v333, %v373
        %vm382 = vcmp.eq.s32.totalorder %v334, %v373
        %vm383 = vcmp.eq.s32.totalorder %v335, %v373
        %vm384 = vcmp.eq.s32.totalorder %v336, %v373
        %vm385 = vcmp.eq.s32.totalorder %v337, %v373
        %vm386 = vcmp.eq.s32.totalorder %v338, %v373
        %vm387 = vcmp.eq.s32.totalorder %v339, %v373
        %vm388 = vcmp.eq.s32.totalorder %v340, %v373
        %vm389 = vcmp.eq.s32.totalorder %v341, %v373
        %vm390 = vmor %vm350, %vm374
        %vm391 = vmor %vm351, %vm375
        %vm392 = vmor %vm352, %vm376
        %vm393 = vmor %vm353, %vm377
        %vm394 = vmor %vm354, %vm378
        %vm395 = vmor %vm355, %vm379
        %vm396 = vmor %vm356, %vm380
        %vm397 = vmor %vm357, %vm381
        %vm398 = vmor %vm358, %vm382
        %vm399 = vmor %vm359, %vm383
        %vm400 = vmor %vm360, %vm384
        %vm401 = vmor %vm361, %vm385
        %vm402 = vmor %vm362, %vm386
        %vm403 = vmor %vm363, %vm387
        %vm404 = vmor %vm364, %vm388
        %vm405 = vmor %vm365, %vm389
        %vm406 = vcmp.lt.s32.totalorder %v321, 2
        %vm407 = vmand %vm342, %vm406
        %v408 = vadd.s32 %v321, 25
        %v409 = vsel %vm407, %v408, 4294967295
        %v410 = vlaneseq
        %v411 = vshrl.u32 %v410, 7
        %v412 = vsub.s32 4, %v411
        %v413 = vrot.slane %v409, %v412
        %vm414 = vcmp.eq.s32.totalorder %v326, %v413
        %vm415 = vcmp.eq.s32.totalorder %v327, %v413
        %vm416 = vcmp.eq.s32.totalorder %v328, %v413
        %vm417 = vcmp.eq.s32.totalorder %v329, %v413
        %vm418 = vcmp.eq.s32.totalorder %v330, %v413
        %vm419 = vcmp.eq.s32.totalorder %v331, %v413
        %vm420 = vcmp.eq.s32.totalorder %v332, %v413
        %vm421 = vcmp.eq.s32.totalorder %v333, %v413
        %vm422 = vcmp.eq.s32.totalorder %v334, %v413
        %vm423 = vcmp.eq.s32.totalorder %v335, %v413
        %vm424 = vcmp.eq.s32.totalorder %v336, %v413
        %vm425 = vcmp.eq.s32.totalorder %v337, %v413
        %vm426 = vcmp.eq.s32.totalorder %v338, %v413
        %vm427 = vcmp.eq.s32.totalorder %v339, %v413
        %vm428 = vcmp.eq.s32.totalorder %v340, %v413
        %vm429 = vcmp.eq.s32.totalorder %v341, %v413
        %vm430 = vmor %vm390, %vm414
        %vm431 = vmor %vm391, %vm415
        %vm432 = vmor %vm392, %vm416
        %vm433 = vmor %vm393, %vm417
        %vm434 = vmor %vm394, %vm418
        %vm435 = vmor %vm395, %vm419
        %vm436 = vmor %vm396, %vm420
        %vm437 = vmor %vm397, %vm421
        %vm438 = vmor %vm398, %vm422
        %vm439 = vmor %vm399, %vm423
        %vm440 = vmor %vm400, %vm424
        %vm441 = vmor %vm401, %vm425
        %vm442 = vmor %vm402, %vm426
        %vm443 = vmor %vm403, %vm427
        %vm444 = vmor %vm404, %vm428
        %vm445 = vmor %vm405, %vm429
        %vm446 = vcmp.lt.s32.totalorder %v321, 6
        %vm447 = vmand %vm342, %vm446
        %v448 = vadd.s32 %v321, 27
        %v449 = vsel %vm447, %v448, 4294967295
        %v450 = vlaneseq
        %v451 = vshrl.u32 %v450, 7
        %v452 = vsub.s32 5, %v451
        %v453 = vrot.slane %v449, %v452
        %vm454 = vcmp.eq.s32.totalorder %v326, %v453
        %vm455 = vcmp.eq.s32.totalorder %v327, %v453
        %vm456 = vcmp.eq.s32.totalorder %v328, %v453
        %vm457 = vcmp.eq.s32.totalorder %v329, %v453
        %vm458 = vcmp.eq.s32.totalorder %v330, %v453
        %vm459 = vcmp.eq.s32.totalorder %v331, %v453
        %vm460 = vcmp.eq.s32.totalorder %v332, %v453
        %vm461 = vcmp.eq.s32.totalorder %v333, %v453
        %vm462 = vcmp.eq.s32.totalorder %v334, %v453
        %vm463 = vcmp.eq.s32.totalorder %v335, %v453
        %vm464 = vcmp.eq.s32.totalorder %v336, %v453
        %vm465 = vcmp.eq.s32.totalorder %v337, %v453
        %vm466 = vcmp.eq.s32.totalorder %v338, %v453
        %vm467 = vcmp.eq.s32.totalorder %v339, %v453
        %vm468 = vcmp.eq.s32.totalorder %v340, %v453
        %vm469 = vcmp.eq.s32.totalorder %v341, %v453
        %vm470 = vmor %vm430, %vm454
        %vm471 = vmor %vm431, %vm455
        %vm472 = vmor %vm432, %vm456
        %vm473 = vmor %vm433, %vm457
        %vm474 = vmor %vm434, %vm458
        %vm475 = vmor %vm435, %vm459
        %vm476 = vmor %vm436, %vm460
        %vm477 = vmor %vm437, %vm461
        %vm478 = vmor %vm438, %vm462
        %vm479 = vmor %vm439, %vm463
        %vm480 = vmor %vm440, %vm464
        %vm481 = vmor %vm441, %vm465
        %vm482 = vmor %vm442, %vm466
        %vm483 = vmor %vm443, %vm467
        %vm484 = vmor %vm444, %vm468
        %vm485 = vmor %vm445, %vm469
        %vm486 = vcmp.lt.s32.totalorder %v321, 42
        %vm487 = vmand %vm342, %vm486
        %v488 = vadd.s32 %v321, 33
        %v489 = vsel %vm487, %v488, 4294967295
        %v490 = vlaneseq
        %v491 = vshrl.u32 %v490, 7
        %v492 = vsub.s32 6, %v491
        %v493 = vrot.slane %v489, %v492
        %vm494 = vcmp.eq.s32.totalorder %v326, %v493
        %vm495 = vcmp.eq.s32.totalorder %v327, %v493
        %vm496 = vcmp.eq.s32.totalorder %v328, %v493
        %vm497 = vcmp.eq.s32.totalorder %v329, %v493
        %vm498 = vcmp.eq.s32.totalorder %v330, %v493
        %vm499 = vcmp.eq.s32.totalorder %v331, %v493
        %vm500 = vcmp.eq.s32.totalorder %v332, %v493
        %vm501 = vcmp.eq.s32.totalorder %v333, %v493
        %vm502 = vcmp.eq.s32.totalorder %v334, %v493
        %vm503 = vcmp.eq.s32.totalorder %v335, %v493
        %vm504 = vcmp.eq.s32.totalorder %v336, %v493
        %vm505 = vcmp.eq.s32.totalorder %v337, %v493
        %vm506 = vcmp.eq.s32.totalorder %v338, %v493
        %vm507 = vcmp.eq.s32.totalorder %v339, %v493
        %vm508 = vcmp.eq.s32.totalorder %v340, %v493
        %vm509 = vcmp.eq.s32.totalorder %v341, %v493
        %vm510 = vmor %vm470, %vm494
        %vm511 = vmor %vm471, %vm495
        %vm512 = vmor %vm472, %vm496
        %vm513 = vmor %vm473, %vm497
        %vm514 = vmor %vm474, %vm498
        %vm515 = vmor %vm475, %vm499
        %vm516 = vmor %vm476, %vm500
        %vm517 = vmor %vm477, %vm501
        %vm518 = vmor %vm478, %vm502
        %vm519 = vmor %vm479, %vm503
        %vm520 = vmor %vm480, %vm504
        %vm521 = vmor %vm481, %vm505
        %vm522 = vmor %vm482, %vm506
        %vm523 = vmor %vm483, %vm507
        %vm524 = vmor %vm484, %vm508
        %vm525 = vmor %vm485, %vm509
        %vm526 = vcmp.lt.s32.totalorder %v321, 15
        %vm527 = vmand %vm342, %vm526
        %v528 = vadd.s32 %v321, 75
        %v529 = vsel %vm527, %v528, 4294967295
        %v530 = vlaneseq
        %v531 = vshrl.u32 %v530, 7
        %v532 = vsub.s32 7, %v531
        %v533 = vrot.slane %v529, %v532
        %vm534 = vcmp.eq.s32.totalorder %v326, %v533
        %vm535 = vcmp.eq.s32.totalorder %v327, %v533
        %vm536 = vcmp.eq.s32.totalorder %v328, %v533
        %vm537 = vcmp.eq.s32.totalorder %v329, %v533
        %vm538 = vcmp.eq.s32.totalorder %v330, %v533
        %vm539 = vcmp.eq.s32.totalorder %v331, %v533
        %vm540 = vcmp.eq.s32.totalorder %v332, %v533
        %vm541 = vcmp.eq.s32.totalorder %v333, %v533
        %vm542 = vcmp.eq.s32.totalorder %v334, %v533
        %vm543 = vcmp.eq.s32.totalorder %v335, %v533
        %vm544 = vcmp.eq.s32.totalorder %v336, %v533
        %vm545 = vcmp.eq.s32.totalorder %v337, %v533
        %vm546 = vcmp.eq.s32.totalorder %v338, %v533
        %vm547 = vcmp.eq.s32.totalorder %v339, %v533
        %vm548 = vcmp.eq.s32.totalorder %v340, %v533
        %vm549 = vcmp.eq.s32.totalorder %v341, %v533
        %vm550 = vmor %vm510, %vm534
        %vm551 = vmor %vm511, %vm535
        %vm552 = vmor %vm512, %vm536
        %vm553 = vmor %vm513, %vm537
        %vm554 = vmor %vm514, %vm538
        %vm555 = vmor %vm515, %vm539
        %vm556 = vmor %vm516, %vm540
        %vm557 = vmor %vm517, %vm541
        %vm558 = vmor %vm518, %vm542
        %vm559 = vmor %vm519, %vm543
        %vm560 = vmor %vm520, %vm544
        %vm561 = vmor %vm521, %vm545
        %vm562 = vmor %vm522, %vm546
        %vm563 = vmor %vm523, %vm547
        %vm564 = vmor %vm524, %vm548
        %vm565 = vmor %vm525, %vm549
        %v566 = vsel %vm550, 1, 0
        %v567 = vsel %vm551, 1, 0
        %v568 = vsel %vm552, 1, 0
        %v569 = vsel %vm553, 1, 0
        %v570 = vsel %vm554, 1, 0
        %v571 = vsel %vm555, 1, 0
        %v572 = vsel %vm556, 1, 0
        %v573 = vsel %vm557, 1, 0
        %v574 = vsel %vm558, 1, 0
        %v575 = vsel %vm559, 1, 0
        %v576 = vsel %vm560, 1, 0
        %v577 = vsel %vm561, 1, 0
        %v578 = vsel %vm562, 1, 0
        %v579 = vsel %vm563, 1, 0
        %v580 = vsel %vm564, 1, 0
        %v581 = vsel %vm565, 1, 0
        %v582 = vcvt.s32.f32 %v566
        %v583 = vcvt.s32.f32 %v567
        %v584 = vcvt.s32.f32 %v568
        %v585 = vcvt.s32.f32 %v569
        %v586 = vcvt.s32.f32 %v570
        %v587 = vcvt.s32.f32 %v571
        %v588 = vcvt.s32.f32 %v572
        %v589 = vcvt.s32.f32 %v573
        %v590 = vcvt.s32.f32 %v574
        %v591 = vcvt.s32.f32 %v575
        %v592 = vcvt.s32.f32 %v576
        %v593 = vcvt.s32.f32 %v577
        %v594 = vcvt.s32.f32 %v578
        %v595 = vcvt.s32.f32 %v579
        %v596 = vcvt.s32.f32 %v580
        %v597 = vcvt.s32.f32 %v581
        %v598 = vpack.c.bf16 %v583, %v582
        %v599 = vpack.c.bf16 %v585, %v584
        %v600 = vpack.c.bf16 %v587, %v586
        %v601 = vpack.c.bf16 %v589, %v588
        %v602 = vpack.c.bf16 %v591, %v590
        %v603 = vpack.c.bf16 %v593, %v592
        %v604 = vpack.c.bf16 %v595, %v594
        %v605 = vpack.c.bf16 %v597, %v596
        %v606 = vld [vmem:[%s1] sm:$0xf]
        %v607 = vld [vmem:[%s1 + $0x4] sm:$0xf]
        %v608 = vld [vmem:[%s1 + $0x8] sm:$0xf]
        %v609 = vld [vmem:[%s1 + $0xc] sm:$0xf]
        %v610 = vld [vmem:[%s1 + $0x10] sm:$0xf]
        %v611 = vld [vmem:[%s1 + $0x14] sm:$0xf]
        %v612 = vld [vmem:[%s1 + $0x18] sm:$0xf]
        %v613 = vld [vmem:[%s1 + $0x1c] sm:$0xf]
        %v614 = vld [vmem:[%s1 + $0x20] sm:$0xf]
        %v615 = vld [vmem:[%s1 + $0x24] sm:$0xf]
        %v616 = vld [vmem:[%s1 + $0x28] sm:$0xf]
        %v617 = vld [vmem:[%s1 + $0x2c] sm:$0xf]
        %v618 = vld [vmem:[%s1 + $0x30] sm:$0xf]
        %v619 = vld [vmem:[%s1 + $0x34] sm:$0xf]
        %v620 = vld [vmem:[%s1 + $0x38] sm:$0xf]
        %v621 = vld [vmem:[%s1 + $0x3c] sm:$0xf]
        %v622 = vld [vmem:[%s2] sm:$0xff]
        %v623 = vld [vmem:[%s2 + $0x8] sm:$0xff]
        %v624 = vld [vmem:[%s2 + $0x10] sm:$0xff]
        %v625 = vld [vmem:[%s2 + $0x18] sm:$0xff]
        %v626 = vld [vmem:[%s2 + $0x20] sm:$0xff]
        %v627 = vld [vmem:[%s2 + $0x28] sm:$0xff]
        %v628 = vld [vmem:[%s2 + $0x30] sm:$0xff]
        %v629 = vld [vmem:[%s2 + $0x38] sm:$0xff]
        %v630 = vld [vmem:[%s2 + $0x40] sm:$0xff]
        %v631 = vld [vmem:[%s2 + $0x48] sm:$0xff]
        %v632 = vld [vmem:[%s2 + $0x50] sm:$0xff]
        %v633 = vld [vmem:[%s2 + $0x58] sm:$0xff]
        %v634 = vld [vmem:[%s2 + $0x60] sm:$0xff]
        %v635 = vld [vmem:[%s2 + $0x68] sm:$0xff]
        %v636 = vld [vmem:[%s2 + $0x70] sm:$0xff]
        %v637 = vld [vmem:[%s2 + $0x78] sm:$0xff]
        %vm638 = vcmask 64512
        %v640 = vsel %vm638, %v622, 0
        %v643 = vsel %vm638, %v623, 0
        %v646 = vsel %vm638, %v624, 0
        %v649 = vsel %vm638, %v625, 0
        %v652 = vsel %vm638, %v626, 0
        %v655 = vsel %vm638, %v627, 0
        %v658 = vsel %vm638, %v628, 0
        %v661 = vsel %vm638, %v629, 0
        %v664 = vsel %vm638, %v630, 0
        %v667 = vsel %vm638, %v631, 0
        %v670 = vsel %vm638, %v632, 0
        %v673 = vsel %vm638, %v633, 0
        %v676 = vsel %vm638, %v634, 0
        %v679 = vsel %vm638, %v635, 0
        %v682 = vsel %vm638, %v636, 0
        %v685 = vsel %vm638, %v637, 0
        %687 = vmatprep.subr.mxu0 0.0
        %688 = vmatpush1.msra.mxu0 %v324
        %689 = vmatprep.subr.mxu0 0.0
        %690 = vmatpush1.msra.mxu0 0.0
        %691 = vmatprep.subr.mxu0 0.0
        %692 = vmatpush1.msra.mxu0 0.0
        %693 = vmatprep.subr.mxu0 0.0
        %694 = vmatpush1.msra.mxu0 0.0
        %695 = vmatprep.subr.mxu0 0.0
        %696 = vmatpush1.msra.mxu0 0.0
        %697 = vmatprep.subr.mxu0 0.0
        %698 = vmatpush1.msra.mxu0 0.0
        %699 = vmatprep.subr.mxu0 0.0
        %700 = vmatpush1.msra.mxu0 0.0
        %701 = vmatprep.subr.mxu0 0.0
        %702 = vmatpush1.msra.mxu0 0.0
        %703 = vmatprep.subr.mxu0 0.0
        %704 = vmatpush1.msra.mxu0 0.0
        %705 = vmatprep.subr.mxu0 0.0
        %706 = vmatpush1.msra.mxu0 0.0
        %707 = vmatprep.subr.mxu0 0.0
        %708 = vmatpush1.msra.mxu0 0.0
        %709 = vmatprep.subr.mxu0 0.0
        %710 = vmatpush1.msra.mxu0 0.0
        %711 = vmatprep.subr.mxu0 0.0
        %712 = vmatpush1.msra.mxu0 0.0
        %713 = vmatprep.subr.mxu0 0.0
        %714 = vmatpush1.msra.mxu0 0.0
        %715 = vmatprep.subr.mxu0 0.0
        %716 = vmatpush1.msra.mxu0 0.0
        %717 = vmatprep.subr.mxu0 0.0
        %718 = vmatpush1.msra.mxu0 0.0
        %719 = vmatprep.subr.mxu0 0.0
        %720 = vmatpush1.msra.mxu0 0.0
        %721 = vmatprep.subr.mxu0 0.0
        %722 = vmatpush1.msra.mxu0 0.0
        %723 = vmatprep.subr.mxu0 0.0
        %724 = vmatpush1.msra.mxu0 0.0
        %725 = vmatprep.subr.mxu0 0.0
        %726 = vmatpush1.msra.mxu0 0.0
        %727 = vmatprep.subr.mxu0 0.0
        %728 = vmatpush1.msra.mxu0 0.0
        %729 = vmatprep.subr.mxu0 0.0
        %730 = vmatpush1.msra.mxu0 0.0
        %731 = vmatprep.subr.mxu0 0.0
        %732 = vmatpush1.msra.mxu0 0.0
        %733 = vmatprep.subr.mxu0 0.0
        %734 = vmatpush1.msra.mxu0 0.0
        %735 = vmatprep.subr.mxu0 0.0
        %736 = vmatpush1.msra.mxu0 0.0
        %737 = vmatprep.subr.mxu0 0.0
        %738 = vmatpush1.msra.mxu0 0.0
        %739 = vmatprep.subr.mxu0 0.0
        %740 = vmatpush1.msra.mxu0 0.0
        %741 = vmatprep.subr.mxu0 0.0
        %742 = vmatpush1.msra.mxu0 0.0
        %743 = vmatprep.subr.mxu0 0.0
        %744 = vmatpush1.msra.mxu0 0.0
        %745 = vmatprep.subr.mxu0 0.0
        %746 = vmatpush1.msra.mxu0 0.0
        %747 = vmatprep.subr.mxu0 0.0
        %748 = vmatpush1.msra.mxu0 0.0
        %749 = vmatprep.subr.mxu0 0.0
        %750 = vmatpush1.msra.mxu0 0.0
        %751 = vmatprep.mubr.f32.mxu0 0.0
        %752 = vmatmul.mubr.f32.gmra.mrb[0].mxu0 %v640
        %v753 = vpop.f32.mrb[0].mxu0
        %v754 = vadd.f32 0.0, %v753
        %v755 = vpop.f32.mrb[0].mxu0
        %756 = vmatprep.mubr.f32.mxu0 0.0
        %757 = vmatmul.mubr.f32.gmra.mrb[0].mxu0 %v643
        %v758 = vpop.f32.mrb[0].mxu0
        %v759 = vadd.f32 0.0, %v758
        %v760 = vpop.f32.mrb[0].mxu0
        %761 = vmatprep.mubr.f32.mxu0 0.0
        %762 = vmatmul.mubr.f32.gmra.mrb[0].mxu0 %v646
        %v763 = vpop.f32.mrb[0].mxu0
        %v764 = vadd.f32 0.0, %v763
        %v765 = vpop.f32.mrb[0].mxu0
        %766 = vmatprep.mubr.f32.mxu0 0.0
        %767 = vmatmul.mubr.f32.gmra.mrb[0].mxu0 %v649
        %v768 = vpop.f32.mrb[0].mxu0
        %v769 = vadd.f32 0.0, %v768
        %v770 = vpop.f32.mrb[0].mxu0
        %771 = vmatprep.mubr.f32.mxu0 0.0
        %772 = vmatmul.mubr.f32.gmra.mrb[0].mxu0 %v652
        %v773 = vpop.f32.mrb[0].mxu0
        %v774 = vadd.f32 0.0, %v773
        %v775 = vpop.f32.mrb[0].mxu0
        %776 = vmatprep.mubr.f32.mxu0 0.0
        %777 = vmatmul.mubr.f32.gmra.mrb[0].mxu0 %v655
        %v778 = vpop.f32.mrb[0].mxu0
        %v779 = vadd.f32 0.0, %v778
        %v780 = vpop.f32.mrb[0].mxu0
        %781 = vmatprep.mubr.f32.mxu0 0.0
        %782 = vmatmul.mubr.f32.gmra.mrb[0].mxu0 %v658
        %v783 = vpop.f32.mrb[0].mxu0
        %v784 = vadd.f32 0.0, %v783
        %v785 = vpop.f32.mrb[0].mxu0
        %786 = vmatprep.mubr.f32.mxu0 0.0
        %787 = vmatmul.mubr.f32.gmra.mrb[0].mxu0 %v661
        %v788 = vpop.f32.mrb[0].mxu0
        %v789 = vadd.f32 0.0, %v788
        %v790 = vpop.f32.mrb[0].mxu0
        %791 = vmatprep.mubr.f32.mxu0 0.0
        %792 = vmatmul.mubr.f32.gmra.mrb[0].mxu0 %v664
        %v793 = vpop.f32.mrb[0].mxu0
        %v794 = vadd.f32 0.0, %v793
        %v795 = vpop.f32.mrb[0].mxu0
        %796 = vmatprep.mubr.f32.mxu0 0.0
        %797 = vmatmul.mubr.f32.gmra.mrb[0].mxu0 %v667
        %v798 = vpop.f32.mrb[0].mxu0
        %v799 = vadd.f32 0.0, %v798
        %v800 = vpop.f32.mrb[0].mxu0
        %801 = vmatprep.mubr.f32.mxu0 0.0
        %802 = vmatmul.mubr.f32.gmra.mrb[0].mxu0 %v670
        %v803 = vpop.f32.mrb[0].mxu0
        %v804 = vadd.f32 0.0, %v803
        %v805 = vpop.f32.mrb[0].mxu0
        %806 = vmatprep.mubr.f32.mxu0 0.0
        %807 = vmatmul.mubr.f32.gmra.mrb[0].mxu0 %v673
        %v808 = vpop.f32.mrb[0].mxu0
        %v809 = vadd.f32 0.0, %v808
        %v810 = vpop.f32.mrb[0].mxu0
        %811 = vmatprep.mubr.f32.mxu0 0.0
        %812 = vmatmul.mubr.f32.gmra.mrb[0].mxu0 %v676
        %v813 = vpop.f32.mrb[0].mxu0
        %v814 = vadd.f32 0.0, %v813
        %v815 = vpop.f32.mrb[0].mxu0
        %816 = vmatprep.mubr.f32.mxu0 0.0
        %817 = vmatmul.mubr.f32.gmra.mrb[0].mxu0 %v679
        %v818 = vpop.f32.mrb[0].mxu0
        %v819 = vadd.f32 0.0, %v818
        %v820 = vpop.f32.mrb[0].mxu0
        %821 = vmatprep.mubr.f32.mxu0 0.0
        %822 = vmatmul.mubr.f32.gmra.mrb[0].mxu0 %v682
        %v823 = vpop.f32.mrb[0].mxu0
        %v824 = vadd.f32 0.0, %v823
        %v825 = vpop.f32.mrb[0].mxu0
        %826 = vmatprep.mubr.f32.mxu0 0.0
        %827 = vmatmul.mubr.f32.gmra.mrb[0].mxu0 %v685
        %v828 = vpop.f32.mrb[0].mxu0
        %v829 = vadd.f32 0.0, %v828
        %v830 = vpop.f32.mrb[0].mxu0
        %831 = vdwg.mxu0
        %v848 = vunpack.c.l.b16 %v606
        %v849 = vunpack.c.l.b16 %v607
        %v850 = vunpack.c.l.b16 %v608
        %v851 = vunpack.c.l.b16 %v609
        %v852 = vunpack.c.l.b16 %v610
        %v853 = vunpack.c.l.b16 %v611
        %v854 = vunpack.c.l.b16 %v612
        %v855 = vunpack.c.l.b16 %v613
        %v856 = vunpack.c.l.b16 %v614
        %v857 = vunpack.c.l.b16 %v615
        %v858 = vunpack.c.l.b16 %v616
        %v859 = vunpack.c.l.b16 %v617
        %v860 = vunpack.c.l.b16 %v618
        %v861 = vunpack.c.l.b16 %v619
        %v862 = vunpack.c.l.b16 %v620
        %v863 = vunpack.c.l.b16 %v621
        %v864 = vpack.c.b16 %v849, %v848
        %v865 = vpack.c.b16 %v851, %v850
        %v866 = vpack.c.b16 %v853, %v852
        %v867 = vpack.c.b16 %v855, %v854
        %v868 = vpack.c.b16 %v857, %v856
        %v869 = vpack.c.b16 %v859, %v858
        %v870 = vpack.c.b16 %v861, %v860
        %v871 = vpack.c.b16 %v863, %v862
        %880 = vmatprep.subr.bf16.mxu0 0
        %881 = vmatpush1.bf16.msra.mxu0 %v598
        %882 = vmatprep.subr.bf16.mxu0 0
        %883 = vmatpush1.bf16.msra.mxu0 %v599
        %884 = vmatprep.subr.bf16.mxu0 0
        %885 = vmatpush1.bf16.msra.mxu0 %v600
        %886 = vmatprep.subr.bf16.mxu0 0
        %887 = vmatpush1.bf16.msra.mxu0 %v601
        %888 = vmatprep.subr.bf16.mxu0 0
        %889 = vmatpush1.bf16.msra.mxu0 %v602
        %890 = vmatprep.subr.bf16.mxu0 0
        %891 = vmatpush1.bf16.msra.mxu0 %v603
        %892 = vmatprep.subr.bf16.mxu0 0
        %893 = vmatpush1.bf16.msra.mxu0 %v604
        %894 = vmatprep.subr.bf16.mxu0 0
        %895 = vmatpush1.bf16.msra.mxu0 %v605
        %896 = vmatprep.subr.bf16.mxu0 0
        %897 = vmatpush1.bf16.msra.mxu0 0
        %898 = vmatprep.subr.bf16.mxu0 0
        %899 = vmatpush1.bf16.msra.mxu0 0
        %900 = vmatprep.subr.bf16.mxu0 0
        %901 = vmatpush1.bf16.msra.mxu0 0
        %902 = vmatprep.subr.bf16.mxu0 0
        %903 = vmatpush1.bf16.msra.mxu0 0
        %904 = vmatprep.subr.bf16.mxu0 0
        %905 = vmatpush1.bf16.msra.mxu0 0
        %906 = vmatprep.subr.bf16.mxu0 0
        %907 = vmatpush1.bf16.msra.mxu0 0
        %908 = vmatprep.subr.bf16.mxu0 0
        %909 = vmatpush1.bf16.msra.mxu0 0
        %910 = vmatprep.subr.bf16.mxu0 0
        %911 = vmatpush1.bf16.msra.mxu0 0
        %912 = vmatprep.mubr.bf16.mxu0 0
        %913 = vmatmul.mubr.bf16.gmra.mrb[0].mxu0 %v864
        %v914 = vpop.f32.mrb[0].mxu0
        %v915 = vadd.f32 %v754, %v914
        %v916 = vpop.f32.mrb[0].mxu0
        %v917 = vpop.f32.mrb[0].mxu0
        %v918 = vadd.f32 %v759, %v917
        %v919 = vpop.f32.mrb[0].mxu0
        %920 = vmatprep.mubr.bf16.mxu0 0
        %921 = vmatmul.mubr.bf16.gmra.mrb[0].mxu0 %v865
        %v922 = vpop.f32.mrb[0].mxu0
        %v923 = vadd.f32 %v764, %v922
        %v924 = vpop.f32.mrb[0].mxu0
        %v925 = vpop.f32.mrb[0].mxu0
        %v926 = vadd.f32 %v769, %v925
        %v927 = vpop.f32.mrb[0].mxu0
        %928 = vmatprep.mubr.bf16.mxu0 0
        %929 = vmatmul.mubr.bf16.gmra.mrb[0].mxu0 %v866
        %v930 = vpop.f32.mrb[0].mxu0
        %v931 = vadd.f32 %v774, %v930
        %v932 = vpop.f32.mrb[0].mxu0
        %v933 = vpop.f32.mrb[0].mxu0
        %v934 = vadd.f32 %v779, %v933
        %v935 = vpop.f32.mrb[0].mxu0
        %936 = vmatprep.mubr.bf16.mxu0 0
        %937 = vmatmul.mubr.bf16.gmra.mrb[0].mxu0 %v867
        %v938 = vpop.f32.mrb[0].mxu0
        %v939 = vadd.f32 %v784, %v938
        %v940 = vpop.f32.mrb[0].mxu0
        %v941 = vpop.f32.mrb[0].mxu0
        %v942 = vadd.f32 %v789, %v941
        %v943 = vpop.f32.mrb[0].mxu0
        %944 = vmatprep.mubr.bf16.mxu0 0
        %945 = vmatmul.mubr.bf16.gmra.mrb[0].mxu0 %v868
        %v946 = vpop.f32.mrb[0].mxu0
        %v947 = vadd.f32 %v794, %v946
        %v948 = vpop.f32.mrb[0].mxu0
        %v949 = vpop.f32.mrb[0].mxu0
        %v950 = vadd.f32 %v799, %v949
        %v951 = vpop.f32.mrb[0].mxu0
        %952 = vmatprep.mubr.bf16.mxu0 0
        %953 = vmatmul.mubr.bf16.gmra.mrb[0].mxu0 %v869
        %v954 = vpop.f32.mrb[0].mxu0
        %v955 = vadd.f32 %v804, %v954
        %v956 = vpop.f32.mrb[0].mxu0
        %v957 = vpop.f32.mrb[0].mxu0
        %v958 = vadd.f32 %v809, %v957
        %v959 = vpop.f32.mrb[0].mxu0
        %960 = vmatprep.mubr.bf16.mxu0 0
        %961 = vmatmul.mubr.bf16.gmra.mrb[0].mxu0 %v870
        %v962 = vpop.f32.mrb[0].mxu0
        %v963 = vadd.f32 %v814, %v962
        %v964 = vpop.f32.mrb[0].mxu0
        %v965 = vpop.f32.mrb[0].mxu0
        %v966 = vadd.f32 %v819, %v965
        %v967 = vpop.f32.mrb[0].mxu0
        %968 = vmatprep.mubr.bf16.mxu0 0
        %969 = vmatmul.mubr.bf16.gmra.mrb[0].mxu0 %v871
        %v970 = vpop.f32.mrb[0].mxu0
        %v971 = vadd.f32 %v824, %v970
        %v972 = vpop.f32.mrb[0].mxu0
        %v973 = vpop.f32.mrb[0].mxu0
        %v974 = vadd.f32 %v829, %v973
        %v975 = vpop.f32.mrb[0].mxu0
        %976 = vdwg.mxu0
        %v977 = vld [vmem:[%s6] sm:$0xff]
        %v978 = vld [vmem:[%s6 + $0x8] sm:$0xff]
        %v979 = vld [vmem:[%s6 + $0x10] sm:$0xff]
        %v980 = vld [vmem:[%s6 + $0x18] sm:$0xff]
        %v981 = vld [vmem:[%s6 + $0x20] sm:$0xff]
        %v982 = vld [vmem:[%s6 + $0x28] sm:$0xff]
        %v983 = vld [vmem:[%s6 + $0x30] sm:$0xff]
        %v984 = vld [vmem:[%s6 + $0x38] sm:$0xff]
        %v985 = vld [vmem:[%s6 + $0x40] sm:$0xff]
        %v986 = vld [vmem:[%s6 + $0x48] sm:$0xff]
        %v987 = vld [vmem:[%s6 + $0x50] sm:$0xff]
        %v988 = vld [vmem:[%s6 + $0x58] sm:$0xff]
        %v989 = vld [vmem:[%s6 + $0x60] sm:$0xff]
        %v990 = vld [vmem:[%s6 + $0x68] sm:$0xff]
        %v991 = vld [vmem:[%s6 + $0x70] sm:$0xff]
        %v992 = vld [vmem:[%s6 + $0x78] sm:$0xff]
        %994 = vset.pattern.permute.xlu0 0
        %995 = vperm.xlu0 %994, %v977
        %v996 = vpop.permute.xlu0 %995
        %999 = vset.pattern.permute.xlu0 0
        %1000 = vperm.xlu0 %999, %v978
        %v1001 = vpop.permute.xlu0 %1000
        %1004 = vset.pattern.permute.xlu0 0
        %1005 = vperm.xlu0 %1004, %v979
        %v1006 = vpop.permute.xlu0 %1005
        %1009 = vset.pattern.permute.xlu0 0
        %1010 = vperm.xlu0 %1009, %v980
        %v1011 = vpop.permute.xlu0 %1010
        %1014 = vset.pattern.permute.xlu0 0
        %1015 = vperm.xlu0 %1014, %v981
        %v1016 = vpop.permute.xlu0 %1015
        %1019 = vset.pattern.permute.xlu0 0
        %1020 = vperm.xlu0 %1019, %v982
        %v1021 = vpop.permute.xlu0 %1020
        %1024 = vset.pattern.permute.xlu0 0
        %1025 = vperm.xlu0 %1024, %v983
        %v1026 = vpop.permute.xlu0 %1025
        %1029 = vset.pattern.permute.xlu0 0
        %1030 = vperm.xlu0 %1029, %v984
        %v1031 = vpop.permute.xlu0 %1030
        %1034 = vset.pattern.permute.xlu0 0
        %1035 = vperm.xlu0 %1034, %v985
        %v1036 = vpop.permute.xlu0 %1035
        %1039 = vset.pattern.permute.xlu0 0
        %1040 = vperm.xlu0 %1039, %v986
        %v1041 = vpop.permute.xlu0 %1040
        %1044 = vset.pattern.permute.xlu0 0
        %1045 = vperm.xlu0 %1044, %v987
        %v1046 = vpop.permute.xlu0 %1045
        %1049 = vset.pattern.permute.xlu0 0
        %1050 = vperm.xlu0 %1049, %v988
        %v1051 = vpop.permute.xlu0 %1050
        %1054 = vset.pattern.permute.xlu0 0
        %1055 = vperm.xlu0 %1054, %v989
        %v1056 = vpop.permute.xlu0 %1055
        %1059 = vset.pattern.permute.xlu0 0
        %1060 = vperm.xlu0 %1059, %v990
        %v1061 = vpop.permute.xlu0 %1060
        %1064 = vset.pattern.permute.xlu0 0
        %1065 = vperm.xlu0 %1064, %v991
        %v1066 = vpop.permute.xlu0 %1065
        %1069 = vset.pattern.permute.xlu0 0
        %1070 = vperm.xlu0 %1069, %v992
        %v1071 = vpop.permute.xlu0 %1070
        %v1073 = vadd.f32 %v915, %v996
        %v1074 = vadd.f32 %v918, %v1001
        %v1075 = vadd.f32 %v923, %v1006
        %v1076 = vadd.f32 %v926, %v1011
        %v1077 = vadd.f32 %v931, %v1016
        %v1078 = vadd.f32 %v934, %v1021
        %v1079 = vadd.f32 %v939, %v1026
        %v1080 = vadd.f32 %v942, %v1031
        %v1081 = vadd.f32 %v947, %v1036
        %v1082 = vadd.f32 %v950, %v1041
        %v1083 = vadd.f32 %v955, %v1046
        %v1084 = vadd.f32 %v958, %v1051
        %v1085 = vadd.f32 %v963, %v1056
        %v1086 = vadd.f32 %v966, %v1061
        %v1087 = vadd.f32 %v971, %v1066
        %v1088 = vadd.f32 %v974, %v1071
        %v1089 = vmax.f32 %v1073, 0.0
        %v1090 = vmax.f32 %v1074, 0.0
        %v1091 = vmax.f32 %v1075, 0.0
        %v1092 = vmax.f32 %v1076, 0.0
        %v1093 = vmax.f32 %v1077, 0.0
        %v1094 = vmax.f32 %v1078, 0.0
        %v1095 = vmax.f32 %v1079, 0.0
        %v1096 = vmax.f32 %v1080, 0.0
        %v1097 = vmax.f32 %v1081, 0.0
        %v1098 = vmax.f32 %v1082, 0.0
        %v1099 = vmax.f32 %v1083, 0.0
        %v1100 = vmax.f32 %v1084, 0.0
        %v1101 = vmax.f32 %v1085, 0.0
        %v1102 = vmax.f32 %v1086, 0.0
        %v1103 = vmax.f32 %v1087, 0.0
        %v1104 = vmax.f32 %v1088, 0.0
        %v1105 = vld [vmem:[%s3] sm:$0xf]
        %v1106 = vld [vmem:[%s3 + $0x4] sm:$0xf]
        %v1107 = vld [vmem:[%s3 + $0x8] sm:$0xf]
        %v1108 = vld [vmem:[%s3 + $0xc] sm:$0xf]
        %v1109 = vld [vmem:[%s3 + $0x10] sm:$0xf]
        %v1110 = vld [vmem:[%s3 + $0x14] sm:$0xf]
        %v1111 = vld [vmem:[%s3 + $0x18] sm:$0xf]
        %v1112 = vld [vmem:[%s3 + $0x1c] sm:$0xf]
        %v1113 = vpack.c.bf16 %v1090, %v1089
        %v1114 = vpack.c.bf16 %v1092, %v1091
        %v1115 = vpack.c.bf16 %v1094, %v1093
        %v1116 = vpack.c.bf16 %v1096, %v1095
        %v1117 = vpack.c.bf16 %v1098, %v1097
        %v1118 = vpack.c.bf16 %v1100, %v1099
        %v1119 = vpack.c.bf16 %v1102, %v1101
        %v1120 = vpack.c.bf16 %v1104, %v1103
        %v1121 = vld [vmem:[%s6] sm:$0xff]
        %v1122 = vld [vmem:[%s6 + $0x8] sm:$0xff]
        %v1123 = vld [vmem:[%s6 + $0x10] sm:$0xff]
        %v1124 = vld [vmem:[%s6 + $0x18] sm:$0xff]
        %v1125 = vld [vmem:[%s6 + $0x20] sm:$0xff]
        %v1126 = vld [vmem:[%s6 + $0x28] sm:$0xff]
        %v1127 = vld [vmem:[%s6 + $0x30] sm:$0xff]
        %v1128 = vld [vmem:[%s6 + $0x38] sm:$0xff]
        %1130 = vset.pattern.permute.xlu0 1
        %1131 = vperm.xlu0 %1130, %v1121
        %v1132 = vpop.permute.xlu0 %1131
        %1135 = vset.pattern.permute.xlu0 1
        %1136 = vperm.xlu0 %1135, %v1122
        %v1137 = vpop.permute.xlu0 %1136
        %1140 = vset.pattern.permute.xlu0 1
        %1141 = vperm.xlu0 %1140, %v1123
        %v1142 = vpop.permute.xlu0 %1141
        %1145 = vset.pattern.permute.xlu0 1
        %1146 = vperm.xlu0 %1145, %v1124
        %v1147 = vpop.permute.xlu0 %1146
        %1150 = vset.pattern.permute.xlu0 1
        %1151 = vperm.xlu0 %1150, %v1125
        %v1152 = vpop.permute.xlu0 %1151
        %1155 = vset.pattern.permute.xlu0 1
        %1156 = vperm.xlu0 %1155, %v1126
        %v1157 = vpop.permute.xlu0 %1156
        %1160 = vset.pattern.permute.xlu0 1
        %1161 = vperm.xlu0 %1160, %v1127
        %v1162 = vpop.permute.xlu0 %1161
        %1165 = vset.pattern.permute.xlu0 1
        %1166 = vperm.xlu0 %1165, %v1128
        %v1167 = vpop.permute.xlu0 %1166
        %v1177 = vunpack.c.l.b16 %v1105
        %v1178 = vunpack.c.l.b16 %v1106
        %v1179 = vunpack.c.l.b16 %v1107
        %v1180 = vunpack.c.l.b16 %v1108
        %v1181 = vunpack.c.l.b16 %v1109
        %v1182 = vunpack.c.l.b16 %v1110
        %v1183 = vunpack.c.l.b16 %v1111
        %v1184 = vunpack.c.l.b16 %v1112
        %v1185 = vpack.c.b16 %v1178, %v1177
        %v1186 = vpack.c.b16 %v1180, %v1179
        %v1187 = vpack.c.b16 %v1182, %v1181
        %v1188 = vpack.c.b16 %v1184, %v1183
        %1193 = vmatprep.subr.bf16.mxu0 0
        %1194 = vmatpush1.bf16.msra.mxu0 %v1113
        %1195 = vmatprep.subr.bf16.mxu0 0
        %1196 = vmatpush1.bf16.msra.mxu0 %v1114
        %1197 = vmatprep.subr.bf16.mxu0 0
        %1198 = vmatpush1.bf16.msra.mxu0 %v1115
        %1199 = vmatprep.subr.bf16.mxu0 0
        %1200 = vmatpush1.bf16.msra.mxu0 %v1116
        %1201 = vmatprep.subr.bf16.mxu0 0
        %1202 = vmatpush1.bf16.msra.mxu0 %v1117
        %1203 = vmatprep.subr.bf16.mxu0 0
        %1204 = vmatpush1.bf16.msra.mxu0 %v1118
        %1205 = vmatprep.subr.bf16.mxu0 0
        %1206 = vmatpush1.bf16.msra.mxu0 %v1119
        %1207 = vmatprep.subr.bf16.mxu0 0
        %1208 = vmatpush1.bf16.msra.mxu0 %v1120
        %1209 = vmatprep.subr.bf16.mxu0 0
        %1210 = vmatpush1.bf16.msra.mxu0 0
        %1211 = vmatprep.subr.bf16.mxu0 0
        %1212 = vmatpush1.bf16.msra.mxu0 0
        %1213 = vmatprep.subr.bf16.mxu0 0
        %1214 = vmatpush1.bf16.msra.mxu0 0
        %1215 = vmatprep.subr.bf16.mxu0 0
        %1216 = vmatpush1.bf16.msra.mxu0 0
        %1217 = vmatprep.subr.bf16.mxu0 0
        %1218 = vmatpush1.bf16.msra.mxu0 0
        %1219 = vmatprep.subr.bf16.mxu0 0
        %1220 = vmatpush1.bf16.msra.mxu0 0
        %1221 = vmatprep.subr.bf16.mxu0 0
        %1222 = vmatpush1.bf16.msra.mxu0 0
        %1223 = vmatprep.subr.bf16.mxu0 0
        %1224 = vmatpush1.bf16.msra.mxu0 0
        %1225 = vmatprep.mubr.bf16.mxu0 0
        %1226 = vmatmul.mubr.bf16.gmra.mrb[0].mxu0 %v1185
        %v1227 = vpop.f32.mrb[0].mxu0
        %v1228 = vadd.f32 %v1132, %v1227
        %v1229 = vpop.f32.mrb[0].mxu0
        %v1230 = vpop.f32.mrb[0].mxu0
        %v1231 = vadd.f32 %v1137, %v1230
        %v1232 = vpop.f32.mrb[0].mxu0
        %1233 = vmatprep.mubr.bf16.mxu0 0
        %1234 = vmatmul.mubr.bf16.gmra.mrb[0].mxu0 %v1186
        %v1235 = vpop.f32.mrb[0].mxu0
        %v1236 = vadd.f32 %v1142, %v1235
        %v1237 = vpop.f32.mrb[0].mxu0
        %v1238 = vpop.f32.mrb[0].mxu0
        %v1239 = vadd.f32 %v1147, %v1238
        %v1240 = vpop.f32.mrb[0].mxu0
        %1241 = vmatprep.mubr.bf16.mxu0 0
        %1242 = vmatmul.mubr.bf16.gmra.mrb[0].mxu0 %v1187
        %v1243 = vpop.f32.mrb[0].mxu0
        %v1244 = vadd.f32 %v1152, %v1243
        %v1245 = vpop.f32.mrb[0].mxu0
        %v1246 = vpop.f32.mrb[0].mxu0
        %v1247 = vadd.f32 %v1157, %v1246
        %v1248 = vpop.f32.mrb[0].mxu0
        %1249 = vmatprep.mubr.bf16.mxu0 0
        %1250 = vmatmul.mubr.bf16.gmra.mrb[0].mxu0 %v1188
        %v1251 = vpop.f32.mrb[0].mxu0
        %v1252 = vadd.f32 %v1162, %v1251
        %v1253 = vpop.f32.mrb[0].mxu0
        %v1254 = vpop.f32.mrb[0].mxu0
        %v1255 = vadd.f32 %v1167, %v1254
        %v1256 = vpop.f32.mrb[0].mxu0
        %1257 = vdwg.mxu0
        %v1258 = vmax.f32 %v1228, 0.0
        %v1259 = vmax.f32 %v1231, 0.0
        %v1260 = vmax.f32 %v1236, 0.0
        %v1261 = vmax.f32 %v1239, 0.0
        %v1262 = vmax.f32 %v1244, 0.0
        %v1263 = vmax.f32 %v1247, 0.0
        %v1264 = vmax.f32 %v1252, 0.0
        %v1265 = vmax.f32 %v1255, 0.0
        %v1266 = vld [vmem:[%s4] sm:$0x3]
        %v1267 = vld [vmem:[%s5] sm:$0x3]
        %v1269 = vsel %vm638, %v1267, 0
        %1271 = vmatprep.subr.mxu0 0.0
        %1272 = vmatpush1.msra.mxu0 %v323
        %1273 = vmatprep.subr.mxu0 0.0
        %1274 = vmatpush1.msra.mxu0 0.0
        %1275 = vmatprep.subr.mxu0 0.0
        %1276 = vmatpush1.msra.mxu0 0.0
        %1277 = vmatprep.subr.mxu0 0.0
        %1278 = vmatpush1.msra.mxu0 0.0
        %1279 = vmatprep.subr.mxu0 0.0
        %1280 = vmatpush1.msra.mxu0 0.0
        %1281 = vmatprep.subr.mxu0 0.0
        %1282 = vmatpush1.msra.mxu0 0.0
        %1283 = vmatprep.subr.mxu0 0.0
        %1284 = vmatpush1.msra.mxu0 0.0
        %1285 = vmatprep.subr.mxu0 0.0
        %1286 = vmatpush1.msra.mxu0 0.0
        %1287 = vmatprep.subr.mxu0 0.0
        %1288 = vmatpush1.msra.mxu0 0.0
        %1289 = vmatprep.subr.mxu0 0.0
        %1290 = vmatpush1.msra.mxu0 0.0
        %1291 = vmatprep.subr.mxu0 0.0
        %1292 = vmatpush1.msra.mxu0 0.0
        %1293 = vmatprep.subr.mxu0 0.0
        %1294 = vmatpush1.msra.mxu0 0.0
        %1295 = vmatprep.subr.mxu0 0.0
        %1296 = vmatpush1.msra.mxu0 0.0
        %1297 = vmatprep.subr.mxu0 0.0
        %1298 = vmatpush1.msra.mxu0 0.0
        %1299 = vmatprep.subr.mxu0 0.0
        %1300 = vmatpush1.msra.mxu0 0.0
        %1301 = vmatprep.subr.mxu0 0.0
        %1302 = vmatpush1.msra.mxu0 0.0
        %1303 = vmatprep.subr.mxu0 0.0
        %1304 = vmatpush1.msra.mxu0 0.0
        %1305 = vmatprep.subr.mxu0 0.0
        %1306 = vmatpush1.msra.mxu0 0.0
        %1307 = vmatprep.subr.mxu0 0.0
        %1308 = vmatpush1.msra.mxu0 0.0
        %1309 = vmatprep.subr.mxu0 0.0
        %1310 = vmatpush1.msra.mxu0 0.0
        %1311 = vmatprep.subr.mxu0 0.0
        %1312 = vmatpush1.msra.mxu0 0.0
        %1313 = vmatprep.subr.mxu0 0.0
        %1314 = vmatpush1.msra.mxu0 0.0
        %1315 = vmatprep.subr.mxu0 0.0
        %1316 = vmatpush1.msra.mxu0 0.0
        %1317 = vmatprep.subr.mxu0 0.0
        %1318 = vmatpush1.msra.mxu0 0.0
        %1319 = vmatprep.subr.mxu0 0.0
        %1320 = vmatpush1.msra.mxu0 0.0
        %1321 = vmatprep.subr.mxu0 0.0
        %1322 = vmatpush1.msra.mxu0 0.0
        %1323 = vmatprep.subr.mxu0 0.0
        %1324 = vmatpush1.msra.mxu0 0.0
        %1325 = vmatprep.subr.mxu0 0.0
        %1326 = vmatpush1.msra.mxu0 0.0
        %1327 = vmatprep.subr.mxu0 0.0
        %1328 = vmatpush1.msra.mxu0 0.0
        %1329 = vmatprep.subr.mxu0 0.0
        %1330 = vmatpush1.msra.mxu0 0.0
        %1331 = vmatprep.subr.mxu0 0.0
        %1332 = vmatpush1.msra.mxu0 0.0
        %1333 = vmatprep.subr.mxu0 0.0
        %1334 = vmatpush1.msra.mxu0 0.0
        %1335 = vmatprep.mubr.f32.mxu0 0.0
        %1336 = vmatmul.mubr.f32.gmra.mrb[0].mxu0 %v1269
        %v1337 = vpop.f32.mrb[0].mxu0
        %v1338 = vadd.f32 0.0, %v1337
        %v1339 = vpop.f32.mrb[0].mxu0
        %1340 = vdwg.mxu0
        %vm1341 = vcmask 523264
        %v1343 = vsel %vm1341, %v1266, 0
        %1345 = vmatprep.subr.mxu0 0.0
        %1346 = vmatpush1.msra.mxu0 %v1258
        %1347 = vmatprep.subr.mxu0 0.0
        %1348 = vmatpush1.msra.mxu0 %v1259
        %1349 = vmatprep.subr.mxu0 0.0
        %1350 = vmatpush1.msra.mxu0 %v1260
        %1351 = vmatprep.subr.mxu0 0.0
        %1352 = vmatpush1.msra.mxu0 %v1261
        %1353 = vmatprep.subr.mxu0 0.0
        %1354 = vmatpush1.msra.mxu0 %v1262
        %1355 = vmatprep.subr.mxu0 0.0
        %1356 = vmatpush1.msra.mxu0 %v1263
        %1357 = vmatprep.subr.mxu0 0.0
        %1358 = vmatpush1.msra.mxu0 %v1264
        %1359 = vmatprep.subr.mxu0 0.0
        %1360 = vmatpush1.msra.mxu0 %v1265
        %1361 = vmatprep.subr.mxu0 0.0
        %1362 = vmatpush1.msra.mxu0 0.0
        %1363 = vmatprep.subr.mxu0 0.0
        %1364 = vmatpush1.msra.mxu0 0.0
        %1365 = vmatprep.subr.mxu0 0.0
        %1366 = vmatpush1.msra.mxu0 0.0
        %1367 = vmatprep.subr.mxu0 0.0
        %1368 = vmatpush1.msra.mxu0 0.0
        %1369 = vmatprep.subr.mxu0 0.0
        %1370 = vmatpush1.msra.mxu0 0.0
        %1371 = vmatprep.subr.mxu0 0.0
        %1372 = vmatpush1.msra.mxu0 0.0
        %1373 = vmatprep.subr.mxu0 0.0
        %1374 = vmatpush1.msra.mxu0 0.0
        %1375 = vmatprep.subr.mxu0 0.0
        %1376 = vmatpush1.msra.mxu0 0.0
        %1377 = vmatprep.subr.mxu0 0.0
        %1378 = vmatpush1.msra.mxu0 0.0
        %1379 = vmatprep.subr.mxu0 0.0
        %1380 = vmatpush1.msra.mxu0 0.0
        %1381 = vmatprep.subr.mxu0 0.0
        %1382 = vmatpush1.msra.mxu0 0.0
        %1383 = vmatprep.subr.mxu0 0.0
        %1384 = vmatpush1.msra.mxu0 0.0
        %1385 = vmatprep.subr.mxu0 0.0
        %1386 = vmatpush1.msra.mxu0 0.0
        %1387 = vmatprep.subr.mxu0 0.0
        %1388 = vmatpush1.msra.mxu0 0.0
        %1389 = vmatprep.subr.mxu0 0.0
        %1390 = vmatpush1.msra.mxu0 0.0
        %1391 = vmatprep.subr.mxu0 0.0
        %1392 = vmatpush1.msra.mxu0 0.0
        %1393 = vmatprep.subr.mxu0 0.0
        %1394 = vmatpush1.msra.mxu0 0.0
        %1395 = vmatprep.subr.mxu0 0.0
        %1396 = vmatpush1.msra.mxu0 0.0
        %1397 = vmatprep.subr.mxu0 0.0
        %1398 = vmatpush1.msra.mxu0 0.0
        %1399 = vmatprep.subr.mxu0 0.0
        %1400 = vmatpush1.msra.mxu0 0.0
        %1401 = vmatprep.subr.mxu0 0.0
        %1402 = vmatpush1.msra.mxu0 0.0
        %1403 = vmatprep.subr.mxu0 0.0
        %1404 = vmatpush1.msra.mxu0 0.0
        %1405 = vmatprep.subr.mxu0 0.0
        %1406 = vmatpush1.msra.mxu0 0.0
        %1407 = vmatprep.subr.mxu0 0.0
        %1408 = vmatpush1.msra.mxu0 0.0
        %1409 = vmatprep.mubr.f32.mxu0 0.0
        %1410 = vmatmul.mubr.f32.gmra.mrb[0].mxu0 %v1343
        %v1411 = vpop.f32.mrb[0].mxu0
        %v1412 = vadd.f32 %v1338, %v1411
        %v1413 = vpop.f32.mrb[0].mxu0
        %1414 = vdwg.mxu0
        %v1415 = vld [vmem:[%s6] sm:$0x3]
        %1417 = vset.pattern.permute.xlu0 2
        %1418 = vperm.xlu0 %1417, %v1415
        %v1419 = vpop.permute.xlu0 %1418
        %v1421 = vadd.f32 %v1412, %v1419
        %v1423 = vrot.slane %v1421, 1
        %v1425 = vmax.f32 %v1421, %v1423
        %v1426 = vsub.f32 %v1421, %v1425
        %v1427 = vmul.f32 %v1426, 1.442695
        %v1428 = vpow.pop %v1427
        %v1430 = vrot.slane %v1425, 7
        %v1432 = vsub.f32 %v1421, %v1430
        %v1433 = vmul.f32 %v1432, 1.442695
        %v1434 = vpow.pop %v1433
        %v1436 = vrot.slane %v1434, 1
        %v1438 = vadd.f32 %v1428, %v1436
        %v1439 = vlog2.pop %v1438
        %v1440 = vmul.f32 %v1439, 0.6931472
        %v1441 = vadd.f32 %v1425, %v1440
        %v1442 = vlaneseq
        %v1443 = vshrl.u32 %v1442, 7
        %v1444 = vsub.s32 0, %v1443
        %v1445 = vrot.slane %v1441, %v1444
        %v1446 = vsub.f32 %v1421, %v1445
        %1447 = vst [vmem:[%s318] sm:$0x3] %v1446
        %p1448 = scmp.lt.s32.totalorder %s18, 1
        %s1449 = scalar_select %p1448, %s18, 1
        %s1450 = smul.addr %s1449, 2
        %s1451 = scalar_lea.vmem %s7, %s1450
        // Predicated region
        $region87: #{net_forward.1} parent=81 // pred_check
          %p1452 = pneg %p188
        $region88: #{net_forward.1} parent=81 // pred_check_branch
          %1454 = sbr.rel (%p1452) target = $region90
        $region89: #{net_forward.1} parent=81 // pred_region
          _
        $region90: #{net_forward.1} parent=81 // pred_fallthru
          _
      $region82: #{net_forward.1} parent=5 // pred_fallthru
        _
      %p1455 = scmp.le.s32.totalorder 2, %s13
      // Predicated region
      $region91: #{net_forward.1} parent=5 // pred_check
        %p1456 = pneg %p1455
      $region92: #{net_forward.1} parent=5 // pred_check_branch
        %1458 = sbr.rel (%p1456) target = $region94
      $region93: #{net_forward.1} parent=5 // pred_region
        %s1459 = ssub.s32 %s13, 2
        // Predicated region
        $region95: #{net_forward.1} parent=93 // pred_check
          %p1460 = pneg %p194
        $region96: #{net_forward.1} parent=93 // pred_check_branch
          %1462 = sbr.rel (%p1460) target = $region98
        $region97: #{net_forward.1} parent=93 // pred_region
          %p1463 = scmp.lt.s32.totalorder %s19, 1
          %s1464 = scalar_select %p1463, %s19, 1
          %s1465 = smul.addr %s1464, 2
          %s1466 = scalar_lea.vmem %s7, %s1465
        $region98: #{net_forward.1} parent=93 // pred_fallthru
          _
      $region94: #{net_forward.1} parent=5 // pred_fallthru
        _
    $region6: #{net_forward.1} parent=1 // loop_footer
      %s17 = sadd.s32 1, %s13
    $region7: #{net_forward.1} parent=1 // loop_footer_branch
      %12 = sbr.rel target = $region3
    $region8: #{net_forward.1} parent=1 // loop_exit
      _

</llo_original>
